<compile_context>
chip_gen: v5e
topology: v5e:2x2
jax: 0.10.0
libtpu: 0.0.40
codegen_flags: <defaults>
</compile_context>

<pallas_src>
import jax
import jax.numpy as jnp
from jax.experimental import pallas as pl
from jax.experimental.pallas import tpu as pltpu


def _round_up(x, m):
    return ((x + m - 1) // m) * m


def _pick_pad_rows(W):
    """Smallest pad-row count p >= 2 with (p*W) % 128 == 0 (lane alignment)."""
    for p in range(2, 33):
        if (p * W) % 128 == 0:
            return p
    return 2


def _pick_chunk_rows(H, W, max_lanes=2048):
    """Largest divisor of H with chunk_rows*W <= max_lanes, preferring 128-mult."""
    cands = [d for d in range(1, H + 1) if H % d == 0 and d * W <= max_lanes]
    if not cands:
        return 1
    aligned = [d for d in cands if (d * W) % 128 == 0]
    return max(aligned) if aligned else max(cands)


# ----------------------------------------------------------------------------
# Fused generator kernel: 3x conv3x3 (+bias, relu/relu/tanh) + mask compose
# ----------------------------------------------------------------------------
def _build_fused_forward(B, H, W, cin_p, hidden, out_c):
    """Returns callable (feat, rgbm, w1, b1, w2, b2, w3, b3) -> (B, 2*out_c, H*W)."""
    HW = H * W
    PT = _pick_pad_rows(W)                 # zero pad rows (top & bottom)
    PADHW = (H + 2 * PT) * W               # flat padded spatial extent
    chunk_rows = _pick_chunk_rows(H, W)
    CH = chunk_rows * W                    # lanes per chunk (mult. of 128 if possible)
    num_chunks = H // chunk_rows
    k1 = 9 * cin_p
    k2 = 9 * hidden

    def kernel(feat_ref, rgbm_ref, w1_ref, b1_ref, w2_ref, b2_ref,
               w3_ref, b3_ref, out_ref, buf1, buf2):
        # --- zero only the PT-row pad strips of the hidden buffers (the
        #     interior is fully rewritten every layer; the strips are the
        #     conv "same" row padding read by layers 2/3).  (item #5)
        zstrip = jnp.zeros((hidden, PT * W), jnp.bfloat16)
        hi0 = (H + PT) * W
        buf1[:, 0:PT * W] = zstrip
        buf1[:, hi0:hi0 + PT * W] = zstrip
        buf2[:, 0:PT * W] = zstrip
        buf2[:, hi0:hi0 + PT * W] = zstrip

        # --- hoisted weight / bias loads and column-edge masks (item #8)
        w1 = w1_ref[...]
        b1 = b1_ref[...]
        w2 = w2_ref[...]
        b2 = b2_ref[...]
        w3 = w3_ref[...]
        b3 = b3_ref[...]
        col = jax.lax.broadcasted_iota(jnp.int32, (1, CH), 1) % W
        mask_l = col != 0              # dx = -1 tap: x==0 reads across the row wrap
        mask_r = col != (W - 1)        # dx = +1 tap: x==W-1 reads across the row wrap

        def conv3x3(load, w, b, act, emit):
            # Channels-first flat-spatial conv:
            #   out(cout, CH) = w(cout, 9*cin) @ patches(9*cin, CH)
            # The spatial chunk is the MXU N / lane axis (item #1); the chunk
            # loop is static so every slice offset is a compile-time constant.
            for c in range(num_chunks):
                r = c * chunk_rows
                taps = []
                for dy in (-1, 0, 1):
                    row0 = (r + dy + PT) * W
                    for dx in (-1, 0, 1):
                        slab = load(row0 + dx)                      # (cin, CH) bf16
                        if dx == -1:
                            slab = jnp.where(mask_l, slab, jnp.zeros_like(slab))
                        elif dx == 1:
                            slab = jnp.where(mask_r, slab, jnp.zeros_like(slab))
                        taps.append(slab)
                patches = jnp.concatenate(taps, axis=0)             # (9*cin, CH)
                acc = jnp.dot(w, patches,
                              preferred_element_type=jnp.float32) + b
                acc = jnp.maximum(acc, 0.0) if act == "relu" else jnp.tanh(acc)
                emit(r, acc)

        def store_hidden(dst):
            # Hidden activations stay in bf16 VMEM scratch (item #3); store
            # offsets are 128-aligned by construction of PT / chunk_rows.
            def emit(r, acc):
                base = (r + PT) * W
                dst[:, base:base + CH] = acc.astype(jnp.bfloat16)
            return emit

        def finalize(r, inp3):
            # Fused compose epilogue, fully lane-dense, f32 exact where mask==0.
            off = r * W
            rgb = rgbm_ref[0, 0:out_c, off:off + CH]
            m = rgbm_ref[0, out_c:out_c + 1, off:off + CH]
            out_ref[0, 0:out_c, off:off + CH] = inp3
            out_ref[0, out_c:2 * out_c, off:off + CH] = inp3 * m + rgb * (1.0 - m)

        conv3x3(lambda lo: feat_ref[0, :, lo:lo + CH], w1, b1, "relu",
                store_hidden(buf1))
        conv3x3(lambda lo: buf1[:, lo:lo + CH], w2, b2, "relu",
                store_hidden(buf2))
        conv3x3(lambda lo: buf2[:, lo:lo + CH], w3, b3, "tanh", finalize)

    # Scoped-VMEM sizing: scratch + double-buffered input/output blocks with
    # headroom (item #7).
    bytes_blocks = (cin_p * PADHW * 2                      # feat (bf16)
                    + (out_c + 1) * HW * 4                 # rgbm (f32)
                    + 2 * out_c * HW * 4                   # output (f32)
                    + (hidden * k1 + hidden * k2 + out_c * k2) * 2
                    + (2 * hidden + out_c) * 4)
    need = 2 * hidden * PADHW * 2 + 2 * bytes_blocks
    vmem_limit = int(min(max(2 * need, 32 * 2 ** 20), 100 * 2 ** 20))

    return pl.pallas_call(
        kernel,
        out_shape=jax.ShapeDtypeStruct((B, 2 * out_c, HW), jnp.float32),
        grid_spec=pltpu.PrefetchScalarGridSpec(
            num_scalar_prefetch=0,
            grid=(B,),
            in_specs=[
                pl.BlockSpec((1, cin_p, PADHW), lambda b: (b, 0, 0)),   # bf16 feat
                pl.BlockSpec((1, out_c + 1, HW), lambda b: (b, 0, 0)),  # f32 rgb+mask
                pl.BlockSpec((hidden, k1), lambda b: (0, 0)),
                pl.BlockSpec((hidden, 1), lambda b: (0, 0)),
                pl.BlockSpec((hidden, k2), lambda b: (0, 0)),
                pl.BlockSpec((hidden, 1), lambda b: (0, 0)),
                pl.BlockSpec((out_c, k2), lambda b: (0, 0)),
                pl.BlockSpec((out_c, 1), lambda b: (0, 0)),
            ],
            out_specs=pl.BlockSpec((1, 2 * out_c, HW), lambda b: (b, 0, 0)),
            scratch_shapes=[
                pltpu.VMEM((hidden, PADHW), jnp.bfloat16),
                pltpu.VMEM((hidden, PADHW), jnp.bfloat16),
            ],
        ),
        compiler_params=pltpu.CompilerParams(
            dimension_semantics=("parallel",),
            vmem_limit_bytes=vmem_limit),
    )


# ----------------------------------------------------------------------------
# Parameters (deterministic synthetic init) and forward pass
# ----------------------------------------------------------------------------
def init_params(n_classes, hidden=32, seed=0):
    cin = 3 + 1 + 1 + n_classes            # input, inst_mask, mask, class_map
    key = jax.random.PRNGKey(seed)
    ks = jax.random.split(key, 6)
    s = 0.05
    return {
        "w1": s * jax.random.normal(ks[0], (3, 3, cin, hidden), jnp.float32),
        "b1": s * jax.random.normal(ks[1], (hidden,), jnp.float32),
        "w2": s * jax.random.normal(ks[2], (3, 3, hidden, hidden), jnp.float32),
        "b2": s * jax.random.normal(ks[3], (hidden,), jnp.float32),
        "w3": s * jax.random.normal(ks[4], (3, 3, hidden, 3), jnp.float32),
        "b3": s * jax.random.normal(ks[5], (3,), jnp.float32),
    }


def _flatten_weight(w_hwio, cin_pad=None):
    """(3,3,cin,cout) HWIO -> (cout, 9*cin) with tap-major / channel-minor K."""
    kh, kw, cin, cout = w_hwio.shape
    if cin_pad is not None and cin_pad > cin:
        w_hwio = jnp.pad(w_hwio, ((0, 0), (0, 0), (0, cin_pad - cin), (0, 0)))
        cin = cin_pad
    return jnp.transpose(w_hwio, (3, 0, 1, 2)).reshape(cout, kh * kw * cin)


@jax.jit
def generator_forward(params, input_nchw, inst_mask_nchw, mask_nchw, class_map_nchw):
    """Mirrors generator.forward: returns (inp_img, masked_inp) in NCHW f32."""
    B, _, H, W = input_nchw.shape
    hidden = params["w1"].shape[-1]
    out_c = params["w3"].shape[-1]          # 3

    # Conv input (NCHW is already channels-first -> no transposes needed).
    feat = jnp.concatenate(
        [input_nchw, inst_mask_nchw, mask_nchw, class_map_nchw],
        axis=1).astype(jnp.float32)
    cin = feat.shape[1]
    cin_p = max(16, _round_up(cin, 16))     # bf16-sublane-friendly K pieces
    if cin_p > cin:
        feat = jnp.pad(feat, ((0, 0), (0, cin_p - cin), (0, 0), (0, 0)))

    # Pre-pad PT zero rows top/bottom so the flat (C, (H+2*PT)*W) view already
    # carries the conv "same" row padding (no in-kernel staging copy); ship the
    # conv input in bf16 and only rgb+mask in f32 for the exact compose.
    PT = _pick_pad_rows(W)
    feat = jnp.pad(feat, ((0, 0), (0, 0), (PT, PT), (0, 0)))
    feat_cf = feat.reshape(B, cin_p, (H + 2 * PT) * W).astype(jnp.bfloat16)
    rgbm = jnp.concatenate([input_nchw, mask_nchw], axis=1)
    rgbm = rgbm.reshape(B, out_c + 1, H * W).astype(jnp.float32)

    w1 = _flatten_weight(params["w1"], cin_p).astype(jnp.bfloat16)
    w2 = _flatten_weight(params["w2"]).astype(jnp.bfloat16)
    w3 = _flatten_weight(params["w3"]).astype(jnp.bfloat16)
    b1 = params["b1"].reshape(hidden, 1).astype(jnp.float32)
    b2 = params["b2"].reshape(hidden, 1).astype(jnp.float32)
    b3 = params["b3"].reshape(out_c, 1).astype(jnp.float32)

    fused = _build_fused_forward(B, H, W, cin_p, hidden, out_c)
    out = fused(feat_cf, rgbm, w1, b1, w2, b2, w3, b3)      # (B, 2*out_c, HW)
    out = out.reshape(B, 2 * out_c, H, W)
    return out[:, 0:out_c], out[:, out_c:2 * out_c]


# ----------------------------------------------------------------------------
# Pure-JAX (f32) reference for a sanity check
# ----------------------------------------------------------------------------
def _conv3x3_ref(x_nchw, w_hwio, b):
    y = jax.lax.conv_general_dilated(
        x_nchw, jnp.transpose(w_hwio, (3, 2, 0, 1)),
        window_strides=(1, 1), padding="SAME",
        dimension_numbers=("NCHW", "OIHW", "NCHW"))
    return y + b.reshape(1, -1, 1, 1)


def _generator_ref(params, inp, inst, mask, cls):
    feat = jnp.concatenate([inp, inst, mask, cls], axis=1)
    h = jax.nn.relu(_conv3x3_ref(feat, params["w1"], params["b1"]))
    h = jax.nn.relu(_conv3x3_ref(h, params["w2"], params["b2"]))
    inp_img = jnp.tanh(_conv3x3_ref(h, params["w3"], params["b3"]))
    masked = inp_img * mask + inp * (1.0 - mask)
    return inp_img, masked


# ----------------------------------------------------------------------------
# Demo
# ----------------------------------------------------------------------------
if __name__ == "__main__":
    B, H, W = 2, 16, 16
    n_classes = 4

    key = jax.random.PRNGKey(0)
    k1, k2, k3, k4 = jax.random.split(key, 4)

    input_nchw = jax.random.normal(k1, (B, 3, H, W), jnp.float32)
    inst_mask = (jax.random.uniform(k2, (B, 1, H, W)) > 0.5).astype(jnp.float32)
    mask = (jax.random.uniform(k3, (B, 1, H, W)) > 0.5).astype(jnp.float32)
    class_map = jax.random.normal(k4, (B, n_classes, H, W), jnp.float32)

    params = init_params(n_classes)

    inp_img, masked_inp = generator_forward(
        params, input_nchw, inst_mask, mask, class_map)
    jax.block_until_ready((inp_img, masked_inp))

    assert inp_img.shape == (B, 3, H, W)
    assert masked_inp.shape == (B, 3, H, W)

    # Sanity check against the f32 reference (bf16 MXU operands -> loose tol).
    ref_inp, ref_masked = _generator_ref(
        params, input_nchw, inst_mask, mask, class_map)
    assert float(jnp.max(jnp.abs(inp_img - ref_inp))) < 5e-2
    assert float(jnp.max(jnp.abs(masked_inp - ref_masked))) < 5e-2
    # Exact passthrough where mask == 0.
    pass_err = jnp.where(mask == 0.0, masked_inp - input_nchw, 0.0)
    assert float(jnp.max(jnp.abs(pass_err))) < 1e-7

    print("KERNEL_OK")
</pallas_src>

<mosaic_0001>
module attributes {stable_mosaic.version = 11 : i64} {
  func.func @kernel(%arg0: i32, %arg1: memref<1x16x512xbf16, #tpu.memory_space<vmem>>, %arg2: memref<1x4x256xf32, #tpu.memory_space<vmem>>, %arg3: memref<32x144xbf16, #tpu.memory_space<vmem>>, %arg4: memref<32x1xf32, #tpu.memory_space<vmem>>, %arg5: memref<32x288xbf16, #tpu.memory_space<vmem>>, %arg6: memref<32x1xf32, #tpu.memory_space<vmem>>, %arg7: memref<3x288xbf16, #tpu.memory_space<vmem>>, %arg8: memref<3x1xf32, #tpu.memory_space<vmem>>, %arg9: memref<1x6x256xf32, #tpu.memory_space<vmem>>, %arg10: memref<32x512xbf16, #tpu.memory_space<vmem>>, %arg11: memref<32x512xbf16, #tpu.memory_space<vmem>>) attributes {dimension_semantics = [#tpu.dimension_semantics<parallel>], iteration_bounds = array<i64: 2>, scalar_prefetch = 0 : i64, scratch_operands = 2 : i64, tpu.core_type = #tpu.core_type<tc>, window_params = [{transform_indices = @transform_0, window_bounds = array<i64: 1, 16, 512>}, {transform_indices = @transform_1, window_bounds = array<i64: 1, 4, 256>}, {pipeline_mode = #tpu.pipeline_mode<synchronous>, transform_indices = @transform_2, window_bounds = array<i64: 32, 144>}, {pipeline_mode = #tpu.pipeline_mode<synchronous>, transform_indices = @transform_3, window_bounds = array<i64: 32, 1>}, {pipeline_mode = #tpu.pipeline_mode<synchronous>, transform_indices = @transform_4, window_bounds = array<i64: 32, 288>}, {pipeline_mode = #tpu.pipeline_mode<synchronous>, transform_indices = @transform_5, window_bounds = array<i64: 32, 1>}, {pipeline_mode = #tpu.pipeline_mode<synchronous>, transform_indices = @transform_6, window_bounds = array<i64: 3, 288>}, {pipeline_mode = #tpu.pipeline_mode<synchronous>, transform_indices = @transform_7, window_bounds = array<i64: 3, 1>}, {transform_indices = @transform_8, window_bounds = array<i64: 1, 6, 256>}]} {
    %cst = arith.constant 0.000000e+00 : bf16
    %0 = vector.broadcast %cst : bf16 to vector<32x128xbf16>
    %c0 = arith.constant 0 : index
    %c0_0 = arith.constant 0 : index
    %1 = vector.load %arg10[%c0, %c0_0] : memref<32x512xbf16, #tpu.memory_space<vmem>>, vector<32x128xbf16>
    tpu.vector_store %arg10[%c0, %c0_0], %0 {strides = array<i32>} : memref<32x512xbf16, #tpu.memory_space<vmem>>, vector<32x128xbf16>,
    %c0_1 = arith.constant 0 : index
    %c384 = arith.constant 384 : index
    %2 = vector.load %arg10[%c0_1, %c384] : memref<32x512xbf16, #tpu.memory_space<vmem>>, vector<32x128xbf16>
    tpu.vector_store %arg10[%c0_1, %c384], %0 {strides = array<i32>} : memref<32x512xbf16, #tpu.memory_space<vmem>>, vector<32x128xbf16>,
    %c0_2 = arith.constant 0 : index
    %c0_3 = arith.constant 0 : index
    %3 = vector.load %arg11[%c0_2, %c0_3] : memref<32x512xbf16, #tpu.memory_space<vmem>>, vector<32x128xbf16>
    tpu.vector_store %arg11[%c0_2, %c0_3], %0 {strides = array<i32>} : memref<32x512xbf16, #tpu.memory_space<vmem>>, vector<32x128xbf16>,
    %c0_4 = arith.constant 0 : index
    %c384_5 = arith.constant 384 : index
    %4 = vector.load %arg11[%c0_4, %c384_5] : memref<32x512xbf16, #tpu.memory_space<vmem>>, vector<32x128xbf16>
    tpu.vector_store %arg11[%c0_4, %c384_5], %0 {strides = array<i32>} : memref<32x512xbf16, #tpu.memory_space<vmem>>, vector<32x128xbf16>,
    %c0_6 = arith.constant 0 : index
    %c0_7 = arith.constant 0 : index
    %5 = vector.load %arg3[%c0_6, %c0_7] : memref<32x144xbf16, #tpu.memory_space<vmem>>, vector<32x144xbf16>
    %c0_8 = arith.constant 0 : index
    %c0_9 = arith.constant 0 : index
    %6 = vector.load %arg4[%c0_8, %c0_9] : memref<32x1xf32, #tpu.memory_space<vmem>>, vector<32x1xf32>
    %c0_10 = arith.constant 0 : index
    %c0_11 = arith.constant 0 : index
    %7 = vector.load %arg5[%c0_10, %c0_11] : memref<32x288xbf16, #tpu.memory_space<vmem>>, vector<32x288xbf16>
    %c0_12 = arith.constant 0 : index
    %c0_13 = arith.constant 0 : index
    %8 = vector.load %arg6[%c0_12, %c0_13] : memref<32x1xf32, #tpu.memory_space<vmem>>, vector<32x1xf32>
    %c0_14 = arith.constant 0 : index
    %c0_15 = arith.constant 0 : index
    %9 = vector.load %arg7[%c0_14, %c0_15] : memref<3x288xbf16, #tpu.memory_space<vmem>>, vector<3x288xbf16>
    %c0_16 = arith.constant 0 : index
    %c0_17 = arith.constant 0 : index
    %10 = vector.load %arg8[%c0_16, %c0_17] : memref<3x1xf32, #tpu.memory_space<vmem>>, vector<3x1xf32>
    %11 = tpu.iota {dimensions = array<i32: 1>} : vector<1x256xi32>
    %c16_i32 = arith.constant 16 : i32
    %c0_i32 = arith.constant 0 : i32
    %12 = arith.cmpi eq, %c16_i32, %c0_i32 : i32
    %c1_i32 = arith.constant 1 : i32
    %13 = arith.select %12, %c1_i32, %c16_i32 : i32
    %14 = vector.broadcast %13 : i32 to vector<1x256xi32>
    %15 = arith.remsi %11, %14 : vector<1x256xi32>
    %c0_i32_18 = arith.constant 0 : i32
    %16 = vector.broadcast %c0_i32_18 : i32 to vector<1x256xi32>
    %17 = arith.cmpi ne, %15, %16 : vector<1x256xi32>
    %c0_i32_19 = arith.constant 0 : i32
    %18 = vector.broadcast %c0_i32_19 : i32 to vector<1x256xi32>
    %19 = arith.cmpi slt, %15, %18 : vector<1x256xi32>
    %c0_i32_20 = arith.constant 0 : i32
    %20 = arith.cmpi slt, %13, %c0_i32_20 : i32
    %21 = vector.broadcast %20 : i1 to vector<1x256xi1>
    %22 = vector.broadcast %21 : vector<1x256xi1> to vector<1x256xi1>
    %23 = arith.xori %19, %22 : vector<1x256xi1>
    %24 = arith.andi %23, %17 : vector<1x256xi1>
    %25 = vector.broadcast %13 : i32 to vector<1x256xi32>
    %26 = arith.addi %15, %25 : vector<1x256xi32>
    %27 = arith.select %24, %26, %15 : vector<1x256xi1>, vector<1x256xi32>
    %c0_i32_21 = arith.constant 0 : i32
    %28 = vector.broadcast %c0_i32_21 : i32 to vector<1x256xi32>
    %29 = arith.cmpi ne, %27, %28 : vector<1x256xi32>
    %c15_i32 = arith.constant 15 : i32
    %30 = vector.broadcast %c15_i32 : i32 to vector<1x256xi32>
    %31 = arith.cmpi ne, %27, %30 : vector<1x256xi32>
    %c0_22 = arith.constant 0 : index
    %c0_23 = arith.constant 0 : index
    %c111 = arith.constant 111 : index
    %32 = vector.load %arg1[%c0_22, %c0_23, %c111] : memref<1x16x512xbf16, #tpu.memory_space<vmem>>, vector<1x16x256xbf16>
    %33 = vector.shape_cast %32 : vector<1x16x256xbf16> to vector<16x256xbf16>
    %cst_24 = arith.constant 0.000000e+00 : bf16
    %34 = vector.broadcast %cst_24 : bf16 to vector<16x256xbf16>
    %35 = vector.shape_cast %29 : vector<1x256xi1> to vector<1x256xi1>
    %36 = vector.broadcast %35 : vector<1x256xi1> to vector<16x256xi1>
    %37 = arith.select %36, %33, %34 : vector<16x256xi1>, vector<16x256xbf16>
    %c0_25 = arith.constant 0 : index
    %c0_26 = arith.constant 0 : index
    %c112 = arith.constant 112 : index
    %38 = vector.load %arg1[%c0_25, %c0_26, %c112] : memref<1x16x512xbf16, #tpu.memory_space<vmem>>, vector<1x16x256xbf16>
    %39 = vector.shape_cast %38 : vector<1x16x256xbf16> to vector<16x256xbf16>
    %c0_27 = arith.constant 0 : index
    %c0_28 = arith.constant 0 : index
    %c113 = arith.constant 113 : index
    %40 = vector.load %arg1[%c0_27, %c0_28, %c113] : memref<1x16x512xbf16, #tpu.memory_space<vmem>>, vector<1x16x256xbf16>
    %41 = vector.shape_cast %40 : vector<1x16x256xbf16> to vector<16x256xbf16>
    %cst_29 = arith.constant 0.000000e+00 : bf16
    %42 = vector.broadcast %cst_29 : bf16 to vector<16x256xbf16>
    %43 = vector.shape_cast %31 : vector<1x256xi1> to vector<1x256xi1>
    %44 = vector.broadcast %43 : vector<1x256xi1> to vector<16x256xi1>
    %45 = arith.select %44, %41, %42 : vector<16x256xi1>, vector<16x256xbf16>
    %c0_30 = arith.constant 0 : index
    %c0_31 = arith.constant 0 : index
    %c127 = arith.constant 127 : index
    %46 = vector.load %arg1[%c0_30, %c0_31, %c127] : memref<1x16x512xbf16, #tpu.memory_space<vmem>>, vector<1x16x256xbf16>
    %47 = vector.shape_cast %46 : vector<1x16x256xbf16> to vector<16x256xbf16>
    %cst_32 = arith.constant 0.000000e+00 : bf16
    %48 = vector.broadcast %cst_32 : bf16 to vector<16x256xbf16>
    %49 = vector.shape_cast %29 : vector<1x256xi1> to vector<1x256xi1>
    %50 = vector.broadcast %49 : vector<1x256xi1> to vector<16x256xi1>
    %51 = arith.select %50, %47, %48 : vector<16x256xi1>, vector<16x256xbf16>
    %c0_33 = arith.constant 0 : index
    %c0_34 = arith.constant 0 : index
    %c128 = arith.constant 128 : index
    %52 = vector.load %arg1[%c0_33, %c0_34, %c128] : memref<1x16x512xbf16, #tpu.memory_space<vmem>>, vector<1x16x256xbf16>
    %53 = vector.shape_cast %52 : vector<1x16x256xbf16> to vector<16x256xbf16>
    %c0_35 = arith.constant 0 : index
    %c0_36 = arith.constant 0 : index
    %c129 = arith.constant 129 : index
    %54 = vector.load %arg1[%c0_35, %c0_36, %c129] : memref<1x16x512xbf16, #tpu.memory_space<vmem>>, vector<1x16x256xbf16>
    %55 = vector.shape_cast %54 : vector<1x16x256xbf16> to vector<16x256xbf16>
    %cst_37 = arith.constant 0.000000e+00 : bf16
    %56 = vector.broadcast %cst_37 : bf16 to vector<16x256xbf16>
    %57 = vector.shape_cast %31 : vector<1x256xi1> to vector<1x256xi1>
    %58 = vector.broadcast %57 : vector<1x256xi1> to vector<16x256xi1>
    %59 = arith.select %58, %55, %56 : vector<16x256xi1>, vector<16x256xbf16>
    %c0_38 = arith.constant 0 : index
    %c0_39 = arith.constant 0 : index
    %c143 = arith.constant 143 : index
    %60 = vector.load %arg1[%c0_38, %c0_39, %c143] : memref<1x16x512xbf16, #tpu.memory_space<vmem>>, vector<1x16x256xbf16>
    %61 = vector.shape_cast %60 : vector<1x16x256xbf16> to vector<16x256xbf16>
    %cst_40 = arith.constant 0.000000e+00 : bf16
    %62 = vector.broadcast %cst_40 : bf16 to vector<16x256xbf16>
    %63 = vector.shape_cast %29 : vector<1x256xi1> to vector<1x256xi1>
    %64 = vector.broadcast %63 : vector<1x256xi1> to vector<16x256xi1>
    %65 = arith.select %64, %61, %62 : vector<16x256xi1>, vector<16x256xbf16>
    %c0_41 = arith.constant 0 : index
    %c0_42 = arith.constant 0 : index
    %c144 = arith.constant 144 : index
    %66 = vector.load %arg1[%c0_41, %c0_42, %c144] : memref<1x16x512xbf16, #tpu.memory_space<vmem>>, vector<1x16x256xbf16>
    %67 = vector.shape_cast %66 : vector<1x16x256xbf16> to vector<16x256xbf16>
    %c0_43 = arith.constant 0 : index
    %c0_44 = arith.constant 0 : index
    %c145 = arith.constant 145 : index
    %68 = vector.load %arg1[%c0_43, %c0_44, %c145] : memref<1x16x512xbf16, #tpu.memory_space<vmem>>, vector<1x16x256xbf16>
    %69 = vector.shape_cast %68 : vector<1x16x256xbf16> to vector<16x256xbf16>
    %cst_45 = arith.constant 0.000000e+00 : bf16
    %70 = vector.broadcast %cst_45 : bf16 to vector<16x256xbf16>
    %71 = vector.shape_cast %31 : vector<1x256xi1> to vector<1x256xi1>
    %72 = vector.broadcast %71 : vector<1x256xi1> to vector<16x256xi1>
    %73 = arith.select %72, %69, %70 : vector<16x256xi1>, vector<16x256xbf16>
    %74 = tpu.concatenate %37, %39, %45, %51, %53, %59, %65, %67, %73 in 0 : vector<16x256xbf16>, vector<16x256xbf16>, vector<16x256xbf16>, vector<16x256xbf16>, vector<16x256xbf16>, vector<16x256xbf16>, vector<16x256xbf16>, vector<16x256xbf16>, vector<16x256xbf16> -> vector<144x256xbf16>
    %cst_46 = arith.constant dense<0.000000e+00> : vector<32x256xf32>
    %75 = tpu.matmul %5, %74, %cst_46 {dimension_numbers = #tpu.dot_dimension_numbers<[1], [0], [0], [1], [0, 0, 1, 1], [], []>} : vector<32x144xbf16>, vector<144x256xbf16>, vector<32x256xf32> -> vector<32x256xf32>
    %76 = vector.broadcast %6 : vector<32x1xf32> to vector<32x256xf32>
    %77 = arith.addf %75, %76 : vector<32x256xf32>
    %cst_47 = arith.constant 0.000000e+00 : f32
    %78 = vector.broadcast %cst_47 : f32 to vector<32x256xf32>
    %79 = arith.maximumf %77, %78 : vector<32x256xf32>
    %80 = arith.truncf %79 : vector<32x256xf32> to vector<32x256xbf16>
    %c0_48 = arith.constant 0 : index
    %c128_49 = arith.constant 128 : index
    %81 = vector.load %arg10[%c0_48, %c128_49] : memref<32x512xbf16, #tpu.memory_space<vmem>>, vector<32x256xbf16>
    tpu.vector_store %arg10[%c0_48, %c128_49], %80 {strides = array<i32>} : memref<32x512xbf16, #tpu.memory_space<vmem>>, vector<32x256xbf16>,
    %c0_50 = arith.constant 0 : index
    %c111_51 = arith.constant 111 : index
    %82 = vector.load %arg10[%c0_50, %c111_51] : memref<32x512xbf16, #tpu.memory_space<vmem>>, vector<32x256xbf16>
    %cst_52 = arith.constant 0.000000e+00 : bf16
    %83 = vector.broadcast %cst_52 : bf16 to vector<32x256xbf16>
    %84 = vector.shape_cast %29 : vector<1x256xi1> to vector<1x256xi1>
    %85 = vector.broadcast %84 : vector<1x256xi1> to vector<32x256xi1>
    %86 = arith.select %85, %82, %83 : vector<32x256xi1>, vector<32x256xbf16>
    %c0_53 = arith.constant 0 : index
    %c112_54 = arith.constant 112 : index
    %87 = vector.load %arg10[%c0_53, %c112_54] : memref<32x512xbf16, #tpu.memory_space<vmem>>, vector<32x256xbf16>
    %c0_55 = arith.constant 0 : index
    %c113_56 = arith.constant 113 : index
    %88 = vector.load %arg10[%c0_55, %c113_56] : memref<32x512xbf16, #tpu.memory_space<vmem>>, vector<32x256xbf16>
    %cst_57 = arith.constant 0.000000e+00 : bf16
    %89 = vector.broadcast %cst_57 : bf16 to vector<32x256xbf16>
    %90 = vector.shape_cast %31 : vector<1x256xi1> to vector<1x256xi1>
    %91 = vector.broadcast %90 : vector<1x256xi1> to vector<32x256xi1>
    %92 = arith.select %91, %88, %89 : vector<32x256xi1>, vector<32x256xbf16>
    %c0_58 = arith.constant 0 : index
    %c127_59 = arith.constant 127 : index
    %93 = vector.load %arg10[%c0_58, %c127_59] : memref<32x512xbf16, #tpu.memory_space<vmem>>, vector<32x256xbf16>
    %cst_60 = arith.constant 0.000000e+00 : bf16
    %94 = vector.broadcast %cst_60 : bf16 to vector<32x256xbf16>
    %95 = vector.shape_cast %29 : vector<1x256xi1> to vector<1x256xi1>
    %96 = vector.broadcast %95 : vector<1x256xi1> to vector<32x256xi1>
    %97 = arith.select %96, %93, %94 : vector<32x256xi1>, vector<32x256xbf16>
    %c0_61 = arith.constant 0 : index
    %c128_62 = arith.constant 128 : index
    %98 = vector.load %arg10[%c0_61, %c128_62] : memref<32x512xbf16, #tpu.memory_space<vmem>>, vector<32x256xbf16>
    %c0_63 = arith.constant 0 : index
    %c129_64 = arith.constant 129 : index
    %99 = vector.load %arg10[%c0_63, %c129_64] : memref<32x512xbf16, #tpu.memory_space<vmem>>, vector<32x256xbf16>
    %cst_65 = arith.constant 0.000000e+00 : bf16
    %100 = vector.broadcast %cst_65 : bf16 to vector<32x256xbf16>
    %101 = vector.shape_cast %31 : vector<1x256xi1> to vector<1x256xi1>
    %102 = vector.broadcast %101 : vector<1x256xi1> to vector<32x256xi1>
    %103 = arith.select %102, %99, %100 : vector<32x256xi1>, vector<32x256xbf16>
    %c0_66 = arith.constant 0 : index
    %c143_67 = arith.constant 143 : index
    %104 = vector.load %arg10[%c0_66, %c143_67] : memref<32x512xbf16, #tpu.memory_space<vmem>>, vector<32x256xbf16>
    %cst_68 = arith.constant 0.000000e+00 : bf16
    %105 = vector.broadcast %cst_68 : bf16 to vector<32x256xbf16>
    %106 = vector.shape_cast %29 : vector<1x256xi1> to vector<1x256xi1>
    %107 = vector.broadcast %106 : vector<1x256xi1> to vector<32x256xi1>
    %108 = arith.select %107, %104, %105 : vector<32x256xi1>, vector<32x256xbf16>
    %c0_69 = arith.constant 0 : index
    %c144_70 = arith.constant 144 : index
    %109 = vector.load %arg10[%c0_69, %c144_70] : memref<32x512xbf16, #tpu.memory_space<vmem>>, vector<32x256xbf16>
    %c0_71 = arith.constant 0 : index
    %c145_72 = arith.constant 145 : index
    %110 = vector.load %arg10[%c0_71, %c145_72] : memref<32x512xbf16, #tpu.memory_space<vmem>>, vector<32x256xbf16>
    %cst_73 = arith.constant 0.000000e+00 : bf16
    %111 = vector.broadcast %cst_73 : bf16 to vector<32x256xbf16>
    %112 = vector.shape_cast %31 : vector<1x256xi1> to vector<1x256xi1>
    %113 = vector.broadcast %112 : vector<1x256xi1> to vector<32x256xi1>
    %114 = arith.select %113, %110, %111 : vector<32x256xi1>, vector<32x256xbf16>
    %115 = tpu.concatenate %86, %87, %92, %97, %98, %103, %108, %109, %114 in 0 : vector<32x256xbf16>, vector<32x256xbf16>, vector<32x256xbf16>, vector<32x256xbf16>, vector<32x256xbf16>, vector<32x256xbf16>, vector<32x256xbf16>, vector<32x256xbf16>, vector<32x256xbf16> -> vector<288x256xbf16>
    %cst_74 = arith.constant dense<0.000000e+00> : vector<32x256xf32>
    %116 = tpu.matmul %7, %115, %cst_74 {dimension_numbers = #tpu.dot_dimension_numbers<[1], [0], [0], [1], [0, 0, 1, 1], [], []>} : vector<32x288xbf16>, vector<288x256xbf16>, vector<32x256xf32> -> vector<32x256xf32>
    %117 = vector.broadcast %8 : vector<32x1xf32> to vector<32x256xf32>
    %118 = arith.addf %116, %117 : vector<32x256xf32>
    %cst_75 = arith.constant 0.000000e+00 : f32
    %119 = vector.broadcast %cst_75 : f32 to vector<32x256xf32>
    %120 = arith.maximumf %118, %119 : vector<32x256xf32>
    %121 = arith.truncf %120 : vector<32x256xf32> to vector<32x256xbf16>
    %c0_76 = arith.constant 0 : index
    %c128_77 = arith.constant 128 : index
    %122 = vector.load %arg11[%c0_76, %c128_77] : memref<32x512xbf16, #tpu.memory_space<vmem>>, vector<32x256xbf16>
    tpu.vector_store %arg11[%c0_76, %c128_77], %121 {strides = array<i32>} : memref<32x512xbf16, #tpu.memory_space<vmem>>, vector<32x256xbf16>,
    %c0_78 = arith.constant 0 : index
    %c111_79 = arith.constant 111 : index
    %123 = vector.load %arg11[%c0_78, %c111_79] : memref<32x512xbf16, #tpu.memory_space<vmem>>, vector<32x256xbf16>
    %cst_80 = arith.constant 0.000000e+00 : bf16
    %124 = vector.broadcast %cst_80 : bf16 to vector<32x256xbf16>
    %125 = vector.shape_cast %29 : vector<1x256xi1> to vector<1x256xi1>
    %126 = vector.broadcast %125 : vector<1x256xi1> to vector<32x256xi1>
    %127 = arith.select %126, %123, %124 : vector<32x256xi1>, vector<32x256xbf16>
    %c0_81 = arith.constant 0 : index
    %c112_82 = arith.constant 112 : index
    %128 = vector.load %arg11[%c0_81, %c112_82] : memref<32x512xbf16, #tpu.memory_space<vmem>>, vector<32x256xbf16>
    %c0_83 = arith.constant 0 : index
    %c113_84 = arith.constant 113 : index
    %129 = vector.load %arg11[%c0_83, %c113_84] : memref<32x512xbf16, #tpu.memory_space<vmem>>, vector<32x256xbf16>
    %cst_85 = arith.constant 0.000000e+00 : bf16
    %130 = vector.broadcast %cst_85 : bf16 to vector<32x256xbf16>
    %131 = vector.shape_cast %31 : vector<1x256xi1> to vector<1x256xi1>
    %132 = vector.broadcast %131 : vector<1x256xi1> to vector<32x256xi1>
    %133 = arith.select %132, %129, %130 : vector<32x256xi1>, vector<32x256xbf16>
    %c0_86 = arith.constant 0 : index
    %c127_87 = arith.constant 127 : index
    %134 = vector.load %arg11[%c0_86, %c127_87] : memref<32x512xbf16, #tpu.memory_space<vmem>>, vector<32x256xbf16>
    %cst_88 = arith.constant 0.000000e+00 : bf16
    %135 = vector.broadcast %cst_88 : bf16 to vector<32x256xbf16>
    %136 = vector.shape_cast %29 : vector<1x256xi1> to vector<1x256xi1>
    %137 = vector.broadcast %136 : vector<1x256xi1> to vector<32x256xi1>
    %138 = arith.select %137, %134, %135 : vector<32x256xi1>, vector<32x256xbf16>
    %c0_89 = arith.constant 0 : index
    %c128_90 = arith.constant 128 : index
    %139 = vector.load %arg11[%c0_89, %c128_90] : memref<32x512xbf16, #tpu.memory_space<vmem>>, vector<32x256xbf16>
    %c0_91 = arith.constant 0 : index
    %c129_92 = arith.constant 129 : index
    %140 = vector.load %arg11[%c0_91, %c129_92] : memref<32x512xbf16, #tpu.memory_space<vmem>>, vector<32x256xbf16>
    %cst_93 = arith.constant 0.000000e+00 : bf16
    %141 = vector.broadcast %cst_93 : bf16 to vector<32x256xbf16>
    %142 = vector.shape_cast %31 : vector<1x256xi1> to vector<1x256xi1>
    %143 = vector.broadcast %142 : vector<1x256xi1> to vector<32x256xi1>
    %144 = arith.select %143, %140, %141 : vector<32x256xi1>, vector<32x256xbf16>
    %c0_94 = arith.constant 0 : index
    %c143_95 = arith.constant 143 : index
    %145 = vector.load %arg11[%c0_94, %c143_95] : memref<32x512xbf16, #tpu.memory_space<vmem>>, vector<32x256xbf16>
    %cst_96 = arith.constant 0.000000e+00 : bf16
    %146 = vector.broadcast %cst_96 : bf16 to vector<32x256xbf16>
    %147 = vector.shape_cast %29 : vector<1x256xi1> to vector<1x256xi1>
    %148 = vector.broadcast %147 : vector<1x256xi1> to vector<32x256xi1>
    %149 = arith.select %148, %145, %146 : vector<32x256xi1>, vector<32x256xbf16>
    %c0_97 = arith.constant 0 : index
    %c144_98 = arith.constant 144 : index
    %150 = vector.load %arg11[%c0_97, %c144_98] : memref<32x512xbf16, #tpu.memory_space<vmem>>, vector<32x256xbf16>
    %c0_99 = arith.constant 0 : index
    %c145_100 = arith.constant 145 : index
    %151 = vector.load %arg11[%c0_99, %c145_100] : memref<32x512xbf16, #tpu.memory_space<vmem>>, vector<32x256xbf16>
    %cst_101 = arith.constant 0.000000e+00 : bf16
    %152 = vector.broadcast %cst_101 : bf16 to vector<32x256xbf16>
    %153 = vector.shape_cast %31 : vector<1x256xi1> to vector<1x256xi1>
    %154 = vector.broadcast %153 : vector<1x256xi1> to vector<32x256xi1>
    %155 = arith.select %154, %151, %152 : vector<32x256xi1>, vector<32x256xbf16>
    %156 = tpu.concatenate %127, %128, %133, %138, %139, %144, %149, %150, %155 in 0 : vector<32x256xbf16>, vector<32x256xbf16>, vector<32x256xbf16>, vector<32x256xbf16>, vector<32x256xbf16>, vector<32x256xbf16>, vector<32x256xbf16>, vector<32x256xbf16>, vector<32x256xbf16> -> vector<288x256xbf16>
    %cst_102 = arith.constant dense<0.000000e+00> : vector<3x256xf32>
    %157 = tpu.matmul %9, %156, %cst_102 {dimension_numbers = #tpu.dot_dimension_numbers<[1], [0], [0], [1], [0, 0, 1, 1], [], []>} : vector<3x288xbf16>, vector<288x256xbf16>, vector<3x256xf32> -> vector<3x256xf32>
    %158 = vector.broadcast %10 : vector<3x1xf32> to vector<3x256xf32>
    %159 = arith.addf %157, %158 : vector<3x256xf32>
    %160 = math.tanh %159 : vector<3x256xf32>
    %c0_103 = arith.constant 0 : index
    %c0_104 = arith.constant 0 : index
    %c0_105 = arith.constant 0 : index
    %161 = vector.load %arg2[%c0_103, %c0_104, %c0_105] : memref<1x4x256xf32, #tpu.memory_space<vmem>>, vector<1x3x256xf32>
    %162 = vector.shape_cast %161 : vector<1x3x256xf32> to vector<3x256xf32>
    %c0_106 = arith.constant 0 : index
    %c3 = arith.constant 3 : index
    %c0_107 = arith.constant 0 : index
    %163 = vector.load %arg2[%c0_106, %c3, %c0_107] : memref<1x4x256xf32, #tpu.memory_space<vmem>>, vector<1x1x256xf32>
    %164 = vector.shape_cast %163 : vector<1x1x256xf32> to vector<1x256xf32>
    %c0_108 = arith.constant 0 : index
    %c0_109 = arith.constant 0 : index
    %c0_110 = arith.constant 0 : index
    %165 = vector.load %arg9[%c0_108, %c0_109, %c0_110] : memref<1x6x256xf32, #tpu.memory_space<vmem>>, vector<1x3x256xf32>
    %166 = vector.shape_cast %165 : vector<1x3x256xf32> to vector<3x256xf32>
    %167 = vector.shape_cast %160 : vector<3x256xf32> to vector<1x3x256xf32>
    tpu.vector_store %arg9[%c0_108, %c0_109, %c0_110], %167 {strides = array<i32>} : memref<1x6x256xf32, #tpu.memory_space<vmem>>, vector<1x3x256xf32>,
    %168 = vector.broadcast %164 : vector<1x256xf32> to vector<3x256xf32>
    %169 = arith.mulf %160, %168 : vector<3x256xf32>
    %cst_111 = arith.constant 1.000000e+00 : f32
    %170 = vector.broadcast %cst_111 : f32 to vector<1x256xf32>
    %171 = arith.subf %170, %164 : vector<1x256xf32>
    %172 = vector.broadcast %171 : vector<1x256xf32> to vector<3x256xf32>
    %173 = arith.mulf %162, %172 : vector<3x256xf32>
    %174 = arith.addf %169, %173 : vector<3x256xf32>
    %c0_112 = arith.constant 0 : index
    %c3_113 = arith.constant 3 : index
    %c0_114 = arith.constant 0 : index
    %175 = vector.load %arg9[%c0_112, %c3_113, %c0_114] : memref<1x6x256xf32, #tpu.memory_space<vmem>>, vector<1x3x256xf32>
    %176 = vector.shape_cast %175 : vector<1x3x256xf32> to vector<3x256xf32>
    %177 = vector.shape_cast %174 : vector<3x256xf32> to vector<1x3x256xf32>
    tpu.vector_store %arg9[%c0_112, %c3_113, %c0_114], %177 {strides = array<i32>} : memref<1x6x256xf32, #tpu.memory_space<vmem>>, vector<1x3x256xf32>,
    return
  }
  func.func @transform_0(%arg0: i32) -> (i32, i32, i32) {
    %c0_i32 = arith.constant 0 : i32
    %c0_i32_0 = arith.constant 0 : i32
    %c0_i32_1 = arith.constant 0 : i32
    return %arg0, %c0_i32, %c0_i32_0 : i32, i32, i32
  }
  func.func @transform_1(%arg0: i32) -> (i32, i32, i32) {
    %c0_i32 = arith.constant 0 : i32
    %c0_i32_0 = arith.constant 0 : i32
    %c0_i32_1 = arith.constant 0 : i32
    return %arg0, %c0_i32, %c0_i32_0 : i32, i32, i32
  }
  func.func @transform_2(%arg0: i32) -> (i32, i32) {
    %c0_i32 = arith.constant 0 : i32
    %c0_i32_0 = arith.constant 0 : i32
    %c0_i32_1 = arith.constant 0 : i32
    return %c0_i32, %c0_i32_0 : i32, i32
  }
  func.func @transform_3(%arg0: i32) -> (i32, i32) {
    %c0_i32 = arith.constant 0 : i32
    %c0_i32_0 = arith.constant 0 : i32
    %c0_i32_1 = arith.constant 0 : i32
    return %c0_i32, %c0_i32_0 : i32, i32
  }
  func.func @transform_4(%arg0: i32) -> (i32, i32) {
    %c0_i32 = arith.constant 0 : i32
    %c0_i32_0 = arith.constant 0 : i32
    %c0_i32_1 = arith.constant 0 : i32
    return %c0_i32, %c0_i32_0 : i32, i32
  }
  func.func @transform_5(%arg0: i32) -> (i32, i32) {
    %c0_i32 = arith.constant 0 : i32
    %c0_i32_0 = arith.constant 0 : i32
    %c0_i32_1 = arith.constant 0 : i32
    return %c0_i32, %c0_i32_0 : i32, i32
  }
  func.func @transform_6(%arg0: i32) -> (i32, i32) {
    %c0_i32 = arith.constant 0 : i32
    %c0_i32_0 = arith.constant 0 : i32
    %c0_i32_1 = arith.constant 0 : i32
    return %c0_i32, %c0_i32_0 : i32, i32
  }
  func.func @transform_7(%arg0: i32) -> (i32, i32) {
    %c0_i32 = arith.constant 0 : i32
    %c0_i32_0 = arith.constant 0 : i32
    %c0_i32_1 = arith.constant 0 : i32
    return %c0_i32, %c0_i32_0 : i32, i32
  }
  func.func @transform_8(%arg0: i32) -> (i32, i32, i32) {
    %c0_i32 = arith.constant 0 : i32
    %c0_i32_0 = arith.constant 0 : i32
    %c0_i32_1 = arith.constant 0 : i32
    return %arg0, %c0_i32, %c0_i32_0 : i32, i32, i32
  }
}

</mosaic_0001>

<llo_original>
// kernel: generator_forward.1
$region0: #{generator_forward.1}
  #allocation0 [shape = 'u32[]', space=smem, size = 0x4, offset = 0x4, fixed_abs, tag = 'smem constant byte address 0x4 - core index']
  #allocation1 [shape = 'u32[72,128]{1,0:T(1,128)}', space=vmem, size = 0x9000, scoped, tag = 'internal scratch']
  #allocation2 [shape = 'bf16[32,512]{1,0:T(8,128)(2,1)}', space=vmem, size = 0x8000, scoped, tag = 'scratch operand']
  #allocation3 [shape = 'bf16[32,512]{1,0:T(8,128)(2,1)}', space=vmem, size = 0x8000, scoped, tag = 'scratch operand']
  %s0 = inlined_call_operand.vmem [shape: bf16[2,16,512], index: 0, kind: input, shape index: {}]
  %s1 = inlined_call_operand.vmem [shape: f32[2,4,256], index: 1, kind: input, shape index: {}]
  %s2 = inlined_call_operand.vmem [shape: bf16[32,144], index: 2, kind: input, shape index: {}]
  %s3 = inlined_call_operand.vmem [shape: f32[32,1], index: 3, kind: input, shape index: {}]
  %s4 = inlined_call_operand.vmem [shape: bf16[32,288], index: 4, kind: input, shape index: {}]
  %s5 = inlined_call_operand.vmem [shape: f32[32,1], index: 5, kind: input, shape index: {}]
  %s6 = inlined_call_operand.vmem [shape: bf16[3,288], index: 6, kind: input, shape index: {}]
  %s7 = inlined_call_operand.vmem [shape: f32[3,1], index: 7, kind: input, shape index: {}]
  %s8 = inlined_call_operand.vmem [shape: f32[2,6,256], index: 8, kind: output, shape index: {}]
  %s9 = sld [smem:[#allocation0]]
  $region65: #{generator_forward.1} parent=0
    _
  %s11 = ssub.s32 1, %s9
  %s12 = scalar_select 0, %s11, %s9
  loop: start=0, step=1, limit=4
  $region2: #{generator_forward.1} parent=0 // loop_pre_header
    _
  $region3: #{generator_forward.1} parent=0 // loop_header
    %s14 = sphi 0, %s18
    %p15 = scmp.ge.s32.totalorder %s14, 4
    %s24 = sphi 0, %s26
    %s27 = sphi 0, %s24
    %s28 = sphi 0, %s27
    %s44 = sphi 0, %s28
    %s50 = sphi 0, %s52
    %s53 = sphi 0, %s50
    %s54 = sphi 0, %s53
    %s70 = sphi 0, %s54
    %s74 = sphi 0, %s74
    %s76 = sphi 0, %s74
    %s77 = sphi 0, %s76
    %s91 = sphi 0, %s77
    %s95 = sphi 0, %s95
    %s97 = sphi 0, %s95
    %s98 = sphi 0, %s97
    %s112 = sphi 0, %s98
    %s116 = sphi 0, %s116
    %s118 = sphi 0, %s116
    %s119 = sphi 0, %s118
    %s133 = sphi 0, %s119
    %s137 = sphi 0, %s137
    %s139 = sphi 0, %s137
    %s140 = sphi 0, %s139
    %s154 = sphi 0, %s140
    %s158 = sphi 0, %s158
    %s160 = sphi 0, %s158
    %s161 = sphi 0, %s160
    %s175 = sphi 0, %s161
    %s179 = sphi 0, %s179
    %s181 = sphi 0, %s179
    %s182 = sphi 0, %s181
    %s196 = sphi 0, %s182
    %s202 = sphi 0, %s204
    %s205 = sphi 0, %s202
    %s206 = sphi 0, %s205
    %s222 = sphi 0, %s206
  $region4: #{generator_forward.1} parent=0 // loop_header_branch
    %17 = sbr.rel (%p15) target = $region8
  $region5: #{generator_forward.1} parent=0 // loop_body
    %s19 = ssub.s32 %s14, 1
    %s20 = ssub.s32 %s14, 2
    %s21 = sadd.s32 %s14, 1
    %s22 = ssub.s32 %s14, %s21
    %p23 = scmp.eq.s32.totalorder %s22, 0
    %s25 = sadd.s32 %s24, 1
    %s26 = scalar_select %p23, %s24, %s25
    %p29 = pneg %p23
    %p30 = scmp.eq.s32.totalorder %s14, 1
    %p31 = por %p29, %p30
    %p32 = scmp.ne.s32.totalorder %s24, %s27
    %p33 = scmp.eq.s32.totalorder %s14, 0
    %p34 = por %p32, %p33
    %p35 = scmp.ne.s32.totalorder %s24, %s27
    %p36 = scmp.eq.s32.totalorder %s19, 1
    %p37 = por %p35, %p36
    %p38 = scmp.ne.s32.totalorder %s27, %s28
    %p39 = scmp.eq.s32.totalorder %s19, 0
    %p40 = por %p38, %p39
    %p41 = scmp.ne.s32.totalorder %s27, %s28
    %p42 = scmp.eq.s32.totalorder %s20, 1
    %p43 = por %p41, %p42
    %p45 = scmp.ne.s32.totalorder %s28, %s44
    %p46 = scmp.eq.s32.totalorder %s20, 0
    %p47 = por %p45, %p46
    %s48 = ssub.s32 %s14, %s21
    %p49 = scmp.eq.s32.totalorder %s48, 0
    %s51 = sadd.s32 %s50, 1
    %s52 = scalar_select %p49, %s50, %s51
    %p55 = pneg %p49
    %p56 = scmp.eq.s32.totalorder %s14, 1
    %p57 = por %p55, %p56
    %p58 = scmp.ne.s32.totalorder %s50, %s53
    %p59 = scmp.eq.s32.totalorder %s14, 0
    %p60 = por %p58, %p59
    %p61 = scmp.ne.s32.totalorder %s50, %s53
    %p62 = scmp.eq.s32.totalorder %s19, 1
    %p63 = por %p61, %p62
    %p64 = scmp.ne.s32.totalorder %s53, %s54
    %p65 = scmp.eq.s32.totalorder %s19, 0
    %p66 = por %p64, %p65
    %p67 = scmp.ne.s32.totalorder %s53, %s54
    %p68 = scmp.eq.s32.totalorder %s20, 1
    %p69 = por %p67, %p68
    %p71 = scmp.ne.s32.totalorder %s54, %s70
    %p72 = scmp.eq.s32.totalorder %s20, 0
    %p73 = por %p71, %p72
    %s75 = sadd.s32 %s74, 1
    %p78 = scmp.eq.s32.totalorder %s14, 1
    %p79 = scmp.ne.s32.totalorder %s74, %s76
    %p80 = scmp.eq.s32.totalorder %s14, 0
    %p81 = por %p79, %p80
    %p82 = scmp.ne.s32.totalorder %s74, %s76
    %p83 = scmp.eq.s32.totalorder %s19, 1
    %p84 = por %p82, %p83
    %p85 = scmp.ne.s32.totalorder %s76, %s77
    %p86 = scmp.eq.s32.totalorder %s19, 0
    %p87 = por %p85, %p86
    %p88 = scmp.ne.s32.totalorder %s76, %s77
    %p89 = scmp.eq.s32.totalorder %s20, 1
    %p90 = por %p88, %p89
    %p92 = scmp.ne.s32.totalorder %s77, %s91
    %p93 = scmp.eq.s32.totalorder %s20, 0
    %p94 = por %p92, %p93
    %s96 = sadd.s32 %s95, 1
    %p99 = scmp.eq.s32.totalorder %s14, 1
    %p100 = scmp.ne.s32.totalorder %s95, %s97
    %p101 = scmp.eq.s32.totalorder %s14, 0
    %p102 = por %p100, %p101
    %p103 = scmp.ne.s32.totalorder %s95, %s97
    %p104 = scmp.eq.s32.totalorder %s19, 1
    %p105 = por %p103, %p104
    %p106 = scmp.ne.s32.totalorder %s97, %s98
    %p107 = scmp.eq.s32.totalorder %s19, 0
    %p108 = por %p106, %p107
    %p109 = scmp.ne.s32.totalorder %s97, %s98
    %p110 = scmp.eq.s32.totalorder %s20, 1
    %p111 = por %p109, %p110
    %p113 = scmp.ne.s32.totalorder %s98, %s112
    %p114 = scmp.eq.s32.totalorder %s20, 0
    %p115 = por %p113, %p114
    %s117 = sadd.s32 %s116, 1
    %p120 = scmp.eq.s32.totalorder %s14, 1
    %p121 = scmp.ne.s32.totalorder %s116, %s118
    %p122 = scmp.eq.s32.totalorder %s14, 0
    %p123 = por %p121, %p122
    %p124 = scmp.ne.s32.totalorder %s116, %s118
    %p125 = scmp.eq.s32.totalorder %s19, 1
    %p126 = por %p124, %p125
    %p127 = scmp.ne.s32.totalorder %s118, %s119
    %p128 = scmp.eq.s32.totalorder %s19, 0
    %p129 = por %p127, %p128
    %p130 = scmp.ne.s32.totalorder %s118, %s119
    %p131 = scmp.eq.s32.totalorder %s20, 1
    %p132 = por %p130, %p131
    %p134 = scmp.ne.s32.totalorder %s119, %s133
    %p135 = scmp.eq.s32.totalorder %s20, 0
    %p136 = por %p134, %p135
    %s138 = sadd.s32 %s137, 1
    %p141 = scmp.eq.s32.totalorder %s14, 1
    %p142 = scmp.ne.s32.totalorder %s137, %s139
    %p143 = scmp.eq.s32.totalorder %s14, 0
    %p144 = por %p142, %p143
    %p145 = scmp.ne.s32.totalorder %s137, %s139
    %p146 = scmp.eq.s32.totalorder %s19, 1
    %p147 = por %p145, %p146
    %p148 = scmp.ne.s32.totalorder %s139, %s140
    %p149 = scmp.eq.s32.totalorder %s19, 0
    %p150 = por %p148, %p149
    %p151 = scmp.ne.s32.totalorder %s139, %s140
    %p152 = scmp.eq.s32.totalorder %s20, 1
    %p153 = por %p151, %p152
    %p155 = scmp.ne.s32.totalorder %s140, %s154
    %p156 = scmp.eq.s32.totalorder %s20, 0
    %p157 = por %p155, %p156
    %s159 = sadd.s32 %s158, 1
    %p162 = scmp.eq.s32.totalorder %s14, 1
    %p163 = scmp.ne.s32.totalorder %s158, %s160
    %p164 = scmp.eq.s32.totalorder %s14, 0
    %p165 = por %p163, %p164
    %p166 = scmp.ne.s32.totalorder %s158, %s160
    %p167 = scmp.eq.s32.totalorder %s19, 1
    %p168 = por %p166, %p167
    %p169 = scmp.ne.s32.totalorder %s160, %s161
    %p170 = scmp.eq.s32.totalorder %s19, 0
    %p171 = por %p169, %p170
    %p172 = scmp.ne.s32.totalorder %s160, %s161
    %p173 = scmp.eq.s32.totalorder %s20, 1
    %p174 = por %p172, %p173
    %p176 = scmp.ne.s32.totalorder %s161, %s175
    %p177 = scmp.eq.s32.totalorder %s20, 0
    %p178 = por %p176, %p177
    %s180 = sadd.s32 %s179, 1
    %p183 = scmp.eq.s32.totalorder %s14, 1
    %p184 = scmp.ne.s32.totalorder %s179, %s181
    %p185 = scmp.eq.s32.totalorder %s14, 0
    %p186 = por %p184, %p185
    %p187 = scmp.ne.s32.totalorder %s179, %s181
    %p188 = scmp.eq.s32.totalorder %s19, 1
    %p189 = por %p187, %p188
    %p190 = scmp.ne.s32.totalorder %s181, %s182
    %p191 = scmp.eq.s32.totalorder %s19, 0
    %p192 = por %p190, %p191
    %p193 = scmp.ne.s32.totalorder %s181, %s182
    %p194 = scmp.eq.s32.totalorder %s20, 1
    %p195 = por %p193, %p194
    %p197 = scmp.ne.s32.totalorder %s182, %s196
    %p198 = scmp.eq.s32.totalorder %s20, 0
    %p199 = por %p197, %p198
    %s200 = ssub.s32 %s14, %s21
    %p201 = scmp.eq.s32.totalorder %s200, 0
    %s203 = sadd.s32 %s202, 1
    %s204 = scalar_select %p201, %s202, %s203
    %p207 = pneg %p201
    %p208 = scmp.eq.s32.totalorder %s14, 1
    %p209 = por %p207, %p208
    %p210 = scmp.ne.s32.totalorder %s202, %s205
    %p211 = scmp.eq.s32.totalorder %s14, 0
    %p212 = por %p210, %p211
    %p213 = scmp.ne.s32.totalorder %s202, %s205
    %p214 = scmp.eq.s32.totalorder %s19, 1
    %p215 = por %p213, %p214
    %p216 = scmp.ne.s32.totalorder %s205, %s206
    %p217 = scmp.eq.s32.totalorder %s19, 0
    %p218 = por %p216, %p217
    %p219 = scmp.ne.s32.totalorder %s205, %s206
    %p220 = scmp.eq.s32.totalorder %s20, 1
    %p221 = por %p219, %p220
    %p223 = scmp.ne.s32.totalorder %s206, %s222
    %p224 = scmp.eq.s32.totalorder %s20, 0
    %p225 = por %p223, %p224
    %p226 = scmp.le.s32.totalorder 1, %s14
    %p227 = scmp.lt.s32.totalorder %s14, 3
    %p228 = pnand %p226, %p227
    %p229 = pneg %p228
    // Predicated region
    $region9: #{generator_forward.1} parent=5 // pred_check
      _
    $region10: #{generator_forward.1} parent=5 // pred_check_branch
      %231 = sbr.rel (%p228) target = $region12
    $region11: #{generator_forward.1} parent=5 // pred_region
      %s232 = ssub.s32 %s14, 1
      // Predicated region
      $region13: #{generator_forward.1} parent=11 // pred_check
        %p233 = pneg %p87
      $region14: #{generator_forward.1} parent=11 // pred_check_branch
        %235 = sbr.rel (%p233) target = $region16
      $region15: #{generator_forward.1} parent=11 // pred_region
        _
      $region16: #{generator_forward.1} parent=11 // pred_fallthru
        _
      // Predicated region
      $region17: #{generator_forward.1} parent=11 // pred_check
        %p236 = pneg %p108
      $region18: #{generator_forward.1} parent=11 // pred_check_branch
        %238 = sbr.rel (%p236) target = $region20
      $region19: #{generator_forward.1} parent=11 // pred_region
        _
      $region20: #{generator_forward.1} parent=11 // pred_fallthru
        _
      // Predicated region
      $region21: #{generator_forward.1} parent=11 // pred_check
        %p239 = pneg %p129
      $region22: #{generator_forward.1} parent=11 // pred_check_branch
        %241 = sbr.rel (%p239) target = $region24
      $region23: #{generator_forward.1} parent=11 // pred_region
        _
      $region24: #{generator_forward.1} parent=11 // pred_fallthru
        _
      // Predicated region
      $region25: #{generator_forward.1} parent=11 // pred_check
        %p242 = pneg %p150
      $region26: #{generator_forward.1} parent=11 // pred_check_branch
        %244 = sbr.rel (%p242) target = $region28
      $region27: #{generator_forward.1} parent=11 // pred_region
        _
      $region28: #{generator_forward.1} parent=11 // pred_fallthru
        _
      // Predicated region
      $region29: #{generator_forward.1} parent=11 // pred_check
        %p245 = pneg %p171
      $region30: #{generator_forward.1} parent=11 // pred_check_branch
        %247 = sbr.rel (%p245) target = $region32
      $region31: #{generator_forward.1} parent=11 // pred_region
        _
      $region32: #{generator_forward.1} parent=11 // pred_fallthru
        _
      // Predicated region
      $region33: #{generator_forward.1} parent=11 // pred_check
        %p248 = pneg %p192
      $region34: #{generator_forward.1} parent=11 // pred_check_branch
        %250 = sbr.rel (%p248) target = $region36
      $region35: #{generator_forward.1} parent=11 // pred_region
        _
      $region36: #{generator_forward.1} parent=11 // pred_fallthru
        _
    $region12: #{generator_forward.1} parent=5 // pred_fallthru
      _
    %p251 = scmp.lt.s32.totalorder %s14, 2
    // Predicated region
    $region37: #{generator_forward.1} parent=5 // pred_check
      %p252 = pneg %p251
    $region38: #{generator_forward.1} parent=5 // pred_check_branch
      %254 = sbr.rel (%p252) target = $region40
    $region39: #{generator_forward.1} parent=5 // pred_region
      // Predicated region
      $region41: #{generator_forward.1} parent=39 // pred_check
        %p255 = pneg %p34
      $region42: #{generator_forward.1} parent=39 // pred_check_branch
        %257 = sbr.rel (%p255) target = $region44
      $region43: #{generator_forward.1} parent=39 // pred_region
        %p258 = scmp.lt.s32.totalorder %s14, 1
        %s259 = scalar_select %p258, %s14, 1
        %s260 = smul.addr %s259, 8
        %s261 = smul.addr %s260, 4
        %s262 = scalar_lea.vmem %s0, %s261
      $region44: #{generator_forward.1} parent=39 // pred_fallthru
        _
      // Predicated region
      $region45: #{generator_forward.1} parent=39 // pred_check
        %p263 = pneg %p60
      $region46: #{generator_forward.1} parent=39 // pred_check_branch
        %265 = sbr.rel (%p263) target = $region48
      $region47: #{generator_forward.1} parent=39 // pred_region
        %p266 = scmp.lt.s32.totalorder %s14, 1
        %s267 = scalar_select %p266, %s14, 1
        %s268 = smul.addr %s267, 2
        %s269 = smul.addr %s268, 4
        %s270 = scalar_lea.vmem %s1, %s269
      $region48: #{generator_forward.1} parent=39 // pred_fallthru
        _
    $region40: #{generator_forward.1} parent=5 // pred_fallthru
      _
    %p271 = scmp.le.s32.totalorder 1, %s14
    %p272 = scmp.lt.s32.totalorder %s14, 3
    %p273 = pnand %p271, %p272
    %p274 = pneg %p273
    // Predicated region
    $region49: #{generator_forward.1} parent=5 // pred_check
      _
    $region50: #{generator_forward.1} parent=5 // pred_check_branch
      %276 = sbr.rel (%p273) target = $region52
    $region51: #{generator_forward.1} parent=5 // pred_region
      %s277 = ssub.s32 %s14, 1
      %p278 = scmp.lt.s32.totalorder %s19, 1
      %s279 = scalar_select %p278, %s19, 1
      %s280 = smul.addr %s279, 8
      %s281 = smul.addr %s280, 4
      %s282 = scalar_lea.vmem %s0, %s281
      %p283 = pneg %p40
      %p284 = pneg %p37
      %p285 = scmp.lt.s32.totalorder %s19, 1
      %s286 = scalar_select %p285, %s19, 1
      %s287 = smul.addr %s286, 2
      %s288 = smul.addr %s287, 4
      %s289 = scalar_lea.vmem %s1, %s288
      %p290 = pneg %p66
      %p291 = pneg %p63
      %p292 = pneg %p87
      %p293 = pneg %p84
      %p294 = pneg %p108
      %p295 = pneg %p105
      %p296 = pneg %p129
      %p297 = pneg %p126
      %p298 = pneg %p150
      %p299 = pneg %p147
      %p300 = pneg %p171
      %p301 = pneg %p168
      %p302 = pneg %p192
      %p303 = pneg %p189
      %p304 = pneg %p218
      %p305 = pneg %p215
      %p306 = scmp.lt.s32.totalorder %s19, 1
      %s307 = scalar_select %p306, %s19, 1
      %s308 = smul.addr %s307, 2
      %s309 = smul.addr %s308, 8
      %s310 = scalar_lea.vmem %s8, %s309
      %p311 = scmp.lt.s32.totalorder %s19, 1
      %s312 = scalar_select %p311, %s19, 1
      %s313 = smul.addr %s312, 8
      %s314 = smul.addr %s313, 4
      %s315 = scalar_lea.vmem %s0, %s314
      %p316 = scmp.lt.s32.totalorder %s19, 1
      %s317 = scalar_select %p316, %s19, 1
      %s318 = smul.addr %s317, 2
      %s319 = smul.addr %s318, 4
      %s320 = scalar_lea.vmem %s1, %s319
      %p321 = scmp.lt.s32.totalorder %s19, 1
      %s322 = scalar_select %p321, %s19, 1
      %s323 = smul.addr %s322, 2
      %s324 = smul.addr %s323, 8
      %s325 = scalar_lea.vmem %s8, %s324
      %329 = vst [vmem:[#allocation2] sm:$0xf] 0
      %330 = vst [vmem:[#allocation2 + $0x10] sm:$0xf] 0
      %331 = vst [vmem:[#allocation2 + $0x20] sm:$0xf] 0
      %332 = vst [vmem:[#allocation2 + $0x30] sm:$0xf] 0
      %333 = vst [vmem:[#allocation2 + $0xc] sm:$0xf] 0
      %334 = vst [vmem:[#allocation2 + $0x1c] sm:$0xf] 0
      %335 = vst [vmem:[#allocation2 + $0x2c] sm:$0xf] 0
      %336 = vst [vmem:[#allocation2 + $0x3c] sm:$0xf] 0
      %337 = vst [vmem:[#allocation3] sm:$0xf] 0
      %338 = vst [vmem:[#allocation3 + $0x10] sm:$0xf] 0
      %339 = vst [vmem:[#allocation3 + $0x20] sm:$0xf] 0
      %340 = vst [vmem:[#allocation3 + $0x30] sm:$0xf] 0
      %341 = vst [vmem:[#allocation3 + $0xc] sm:$0xf] 0
      %342 = vst [vmem:[#allocation3 + $0x1c] sm:$0xf] 0
      %343 = vst [vmem:[#allocation3 + $0x2c] sm:$0xf] 0
      %344 = vst [vmem:[#allocation3 + $0x3c] sm:$0xf] 0
      %v345 = vld [vmem:[%s2] sm:$0xff]
      %v346 = vld [vmem:[%s2 + $0x8] sm:$0xff]
      %v347 = vld [vmem:[%s2 + $0x10] sm:$0xff]
      %v348 = vld [vmem:[%s2 + $0x18] sm:$0xff]
      %v349 = vld [vmem:[%s3] sm:$0xff]
      %v350 = vld [vmem:[%s3 + $0x8] sm:$0xff]
      %v351 = vld [vmem:[%s3 + $0x10] sm:$0xff]
      %v352 = vld [vmem:[%s3 + $0x18] sm:$0xff]
      %v353 = vld [vmem:[%s4] sm:$0xff]
      %v354 = vld [vmem:[%s4 + $0x8] sm:$0xf]
      %v355 = vld [vmem:[%s4 + $0xc] sm:$0xff]
      %v356 = vld [vmem:[%s4 + $0x14] sm:$0xf]
      %v357 = vld [vmem:[%s4 + $0x18] sm:$0xff]
      %v358 = vld [vmem:[%s4 + $0x20] sm:$0xf]
      %v359 = vld [vmem:[%s4 + $0x24] sm:$0xff]
      %v360 = vld [vmem:[%s4 + $0x2c] sm:$0xf]
      %v361 = vld [vmem:[%s5] sm:$0xff]
      %v362 = vld [vmem:[%s5 + $0x8] sm:$0xff]
      %v363 = vld [vmem:[%s5 + $0x10] sm:$0xff]
      %v364 = vld [vmem:[%s5 + $0x18] sm:$0xff]
      %v365 = vld [vmem:[%s6] sm:$0x3f]
      %v366 = vld [vmem:[%s7] sm:$0x7]
      %v367 = vlaneseq
      %v368 = vand.u32 %v367, 127
      %v369 = vadd.s32 %v368, 128
      %vm370 = vcmp.lt.s32.totalorder %v368, 0
      %v371 = vsub.s32 0, %v368
      %v372 = vsel %vm370, %v371, %v368
      %v373 = vshrl.u32 %v372, 4
      %v374 = vand.u32 %v372, 15
      %v375 = vsub.s32 0, %v374
      %v376 = vsel %vm370, %v375, %v374
      %vm377 = vcmp.lt.s32.totalorder %v369, 0
      %v378 = vsub.s32 0, %v369
      %v379 = vsel %vm377, %v378, %v369
      %v380 = vshrl.u32 %v379, 4
      %v381 = vand.u32 %v379, 15
      %v382 = vsub.s32 0, %v381
      %v383 = vsel %vm377, %v382, %v381
      %vm384 = vcmp.ne.s32.totalorder %v376, 0
      %vm385 = vcmp.ne.s32.totalorder %v383, 0
      %vm386 = vcmp.lt.s32.totalorder %v376, 0
      %vm387 = vcmp.lt.s32.totalorder %v383, 0
      %vm388 = vmand %vm386, %vm384
      %vm389 = vmand %vm387, %vm385
      %v390 = vadd.s32 %v376, 16
      %v391 = vadd.s32 %v383, 16
      %v392 = vsel %vm388, %v390, %v376
      %v393 = vsel %vm389, %v391, %v383
      %vm394 = vcmp.ne.s32.totalorder %v392, 0
      %vm395 = vcmp.ne.s32.totalorder %v393, 0
      %vm396 = vcmp.ne.s32.totalorder %v392, 15
      %vm397 = vcmp.ne.s32.totalorder %v393, 15
      %v398 = vld [vmem:[%s315] sm:$0xff]
      %v399 = vld [vmem:[%s315 + $0x8] sm:$0xf]
      %v400 = vld [vmem:[%s315 + $0x10] sm:$0xff]
      %v401 = vld [vmem:[%s315 + $0x18] sm:$0xf]
      %v402 = vsel %vm394, 1, 0
      %v403 = vsel %vm395, 1, 0
      %vm404 = vcmp.eq.s32.totalorder %v402, 1
      %vm405 = vcmp.eq.s32.totalorder %v403, 1
      %vm406 = vmpackc.low %vm405, %vm404
      %v407 = vsel %vm406, 65537, 0
      %408 = vrot.lane.b32.xlu0 %v407, 111
      %v409 = vpop.permute.xlu0 %408
      %v410 = vrot.slane %v409, 4
      %vm411 = vcmask 908288
      %v412 = vsel %vm411, %v410, %v409
      %v413 = vunpack.c.l.b16 %v412
      %v414 = vunpack.c.h.b16 %v412
      %v415 = vunpack.c.l.b16 0
      %v416 = vunpack.c.h.b16 0
      %vm417 = vcmp.ne.s32.totalorder %v413, %v415
      %vm418 = vcmp.ne.s32.totalorder %v414, %v416
      %vm419 = vmpackc.low %vm418, %vm417
      %v420 = vunpack.c.l.b16 %v410
      %v421 = vunpack.c.h.b16 %v410
      %v422 = vunpack.c.l.b16 0
      %v423 = vunpack.c.h.b16 0
      %vm424 = vcmp.ne.s32.totalorder %v420, %v422
      %vm425 = vcmp.ne.s32.totalorder %v421, %v423
      %vm426 = vmpackc.low %vm425, %vm424
      %v427 = vsel %vm419, %v398, 0
      %v428 = vsel %vm426, %v399, 0
      %v429 = vsel %vm419, %v400, 0
      %v430 = vsel %vm426, %v401, 0
      %v431 = vsel %vm396, 1, 0
      %v432 = vsel %vm397, 1, 0
      %vm433 = vcmp.eq.s32.totalorder %v431, 1
      %vm434 = vcmp.eq.s32.totalorder %v432, 1
      %vm435 = vmpackc.low %vm434, %vm433
      %v436 = vsel %vm435, 65537, 0
      %437 = vrot.lane.b32.xlu0 %v436, 113
      %v438 = vpop.permute.xlu0 %437
      %v439 = vrot.slane %v438, 4
      %vm440 = vcmask 924672
      %v441 = vsel %vm440, %v439, %v438
      %v442 = vunpack.c.l.b16 %v441
      %v443 = vunpack.c.h.b16 %v441
      %v444 = vunpack.c.l.b16 0
      %v445 = vunpack.c.h.b16 0
      %vm446 = vcmp.ne.s32.totalorder %v442, %v444
      %vm447 = vcmp.ne.s32.totalorder %v443, %v445
      %vm448 = vmpackc.low %vm447, %vm446
      %v449 = vunpack.c.l.b16 %v439
      %v450 = vunpack.c.h.b16 %v439
      %v451 = vunpack.c.l.b16 0
      %v452 = vunpack.c.h.b16 0
      %vm453 = vcmp.ne.s32.totalorder %v449, %v451
      %vm454 = vcmp.ne.s32.totalorder %v450, %v452
      %vm455 = vmpackc.low %vm454, %vm453
      %v456 = vsel %vm448, %v398, 0
      %v457 = vsel %vm455, %v399, 0
      %v458 = vsel %vm448, %v400, 0
      %v459 = vsel %vm455, %v401, 0
      %460 = vrot.lane.b32.xlu0 %v407, 127
      %v461 = vpop.permute.xlu0 %460
      %v462 = vrot.slane %v461, 4
      %vm463 = vcmask 1039360
      %v464 = vsel %vm463, %v462, %v461
      %v465 = vunpack.c.l.b16 %v464
      %v466 = vunpack.c.h.b16 %v464
      %v467 = vunpack.c.l.b16 0
      %v468 = vunpack.c.h.b16 0
      %vm469 = vcmp.ne.s32.totalorder %v465, %v467
      %vm470 = vcmp.ne.s32.totalorder %v466, %v468
      %vm471 = vmpackc.low %vm470, %vm469
      %v472 = vunpack.c.l.b16 %v462
      %v473 = vunpack.c.h.b16 %v462
      %v474 = vunpack.c.l.b16 0
      %v475 = vunpack.c.h.b16 0
      %vm476 = vcmp.ne.s32.totalorder %v472, %v474
      %vm477 = vcmp.ne.s32.totalorder %v473, %v475
      %vm478 = vmpackc.low %vm477, %vm476
      %v479 = vsel %vm471, %v398, 0
      %v480 = vsel %vm478, %v399, 0
      %v481 = vsel %vm471, %v400, 0
      %v482 = vsel %vm478, %v401, 0
      %v483 = vld [vmem:[%s315 + $0x4] sm:$0xff]
      %v484 = vld [vmem:[%s315 + $0x14] sm:$0xff]
      %v485 = vld [vmem:[%s315 + $0x4] sm:$0xff]
      %v486 = vld [vmem:[%s315 + $0xc] sm:$0xf]
      %v487 = vld [vmem:[%s315 + $0x14] sm:$0xff]
      %v488 = vld [vmem:[%s315 + $0x1c] sm:$0xf]
      %489 = vrot.lane.b32.xlu0 %v436, 1
      %v490 = vpop.permute.xlu0 %489
      %v491 = vrot.slane %v490, 4
      %vm492 = vcmask 7168
      %v493 = vsel %vm492, %v491, %v490
      %v494 = vunpack.c.l.b16 %v493
      %v495 = vunpack.c.h.b16 %v493
      %v496 = vunpack.c.l.b16 0
      %v497 = vunpack.c.h.b16 0
      %vm498 = vcmp.ne.s32.totalorder %v494, %v496
      %vm499 = vcmp.ne.s32.totalorder %v495, %v497
      %vm500 = vmpackc.low %vm499, %vm498
      %v501 = vunpack.c.l.b16 %v491
      %v502 = vunpack.c.h.b16 %v491
      %v503 = vunpack.c.l.b16 0
      %v504 = vunpack.c.h.b16 0
      %vm505 = vcmp.ne.s32.totalorder %v501, %v503
      %vm506 = vcmp.ne.s32.totalorder %v502, %v504
      %vm507 = vmpackc.low %vm506, %vm505
      %v508 = vsel %vm500, %v485, 0
      %v509 = vsel %vm507, %v486, 0
      %v510 = vsel %vm500, %v487, 0
      %v511 = vsel %vm507, %v488, 0
      %512 = vrot.lane.b32.xlu0 %v407, 15
      %v513 = vpop.permute.xlu0 %512
      %v514 = vrot.slane %v513, 4
      %vm515 = vcmask 121856
      %v516 = vsel %vm515, %v514, %v513
      %v517 = vunpack.c.l.b16 %v516
      %v518 = vunpack.c.h.b16 %v516
      %v519 = vunpack.c.l.b16 0
      %v520 = vunpack.c.h.b16 0
      %vm521 = vcmp.ne.s32.totalorder %v517, %v519
      %vm522 = vcmp.ne.s32.totalorder %v518, %v520
      %vm523 = vmpackc.low %vm522, %vm521
      %v524 = vunpack.c.l.b16 %v514
      %v525 = vunpack.c.h.b16 %v514
      %v526 = vunpack.c.l.b16 0
      %v527 = vunpack.c.h.b16 0
      %vm528 = vcmp.ne.s32.totalorder %v524, %v526
      %vm529 = vcmp.ne.s32.totalorder %v525, %v527
      %vm530 = vmpackc.low %vm529, %vm528
      %v531 = vsel %vm523, %v485, 0
      %v532 = vsel %vm530, %v486, 0
      %v533 = vsel %vm523, %v487, 0
      %v534 = vsel %vm530, %v488, 0
      %535 = vrot.lane.b32.xlu0 %v436, 17
      %v536 = vpop.permute.xlu0 %535
      %v537 = vrot.slane %v536, 4
      %vm538 = vcmask 138240
      %v539 = vsel %vm538, %v537, %v536
      %v540 = vunpack.c.l.b16 %v539
      %v541 = vunpack.c.h.b16 %v539
      %v542 = vunpack.c.l.b16 0
      %v543 = vunpack.c.h.b16 0
      %vm544 = vcmp.ne.s32.totalorder %v540, %v542
      %vm545 = vcmp.ne.s32.totalorder %v541, %v543
      %vm546 = vmpackc.low %vm545, %vm544
      %v547 = vunpack.c.l.b16 %v537
      %v548 = vunpack.c.h.b16 %v537
      %v549 = vunpack.c.l.b16 0
      %v550 = vunpack.c.h.b16 0
      %vm551 = vcmp.ne.s32.totalorder %v547, %v549
      %vm552 = vcmp.ne.s32.totalorder %v548, %v550
      %vm553 = vmpackc.low %vm552, %vm551
      %v554 = vsel %vm546, %v485, 0
      %v555 = vsel %vm553, %v486, 0
      %v556 = vsel %vm546, %v487, 0
      %v557 = vsel %vm553, %v488, 0
      %v562 = vunpack.c.l.b16 %v427
      %v563 = vunpack.c.h.b16 %v427
      %v564 = vunpack.c.l.b16 %v428
      %v565 = vunpack.c.l.b16 %v429
      %v566 = vunpack.c.h.b16 %v429
      %v567 = vunpack.c.l.b16 %v430
      %v568 = vpack.c.b16 %v565, %v562
      %v569 = vpack.c.b16 %v566, %v563
      %v570 = vpack.c.b16 %v567, %v564
      %v575 = vunpack.c.l.b16 %v398
      %v576 = vunpack.c.h.b16 %v398
      %v577 = vunpack.c.l.b16 %v399
      %v578 = vunpack.c.l.b16 %v400
      %v579 = vunpack.c.h.b16 %v400
      %v580 = vunpack.c.l.b16 %v401
      %v581 = vpack.c.b16 %v578, %v575
      %v582 = vpack.c.b16 %v579, %v576
      %v583 = vpack.c.b16 %v580, %v577
      %584 = vrot.lane.b32.xlu0 %v581, 127
      %v585 = vpop.permute.xlu0 %584
      %586 = vrot.lane.b32.xlu0 %v582, 127
      %v587 = vpop.permute.xlu0 %586
      %588 = vrot.lane.b32.xlu0 %v583, 127
      %v589 = vpop.permute.xlu0 %588
      %v590 = vsel %vm463, %v585, %v587
      %v591 = vsel %vm463, %v587, %v589
      %v596 = vunpack.c.l.b16 %v456
      %v597 = vunpack.c.h.b16 %v456
      %v598 = vunpack.c.l.b16 %v457
      %v599 = vunpack.c.l.b16 %v458
      %v600 = vunpack.c.h.b16 %v458
      %v601 = vunpack.c.l.b16 %v459
      %v602 = vpack.c.b16 %v599, %v596
      %v603 = vpack.c.b16 %v600, %v597
      %v604 = vpack.c.b16 %v601, %v598
      %605 = vrot.lane.b32.xlu0 %v602, 126
      %v606 = vpop.permute.xlu0 %605
      %607 = vrot.lane.b32.xlu0 %v603, 126
      %v608 = vpop.permute.xlu0 %607
      %609 = vrot.lane.b32.xlu0 %v604, 126
      %v610 = vpop.permute.xlu0 %609
      %vm611 = vcmask 1031168
      %v612 = vsel %vm611, %v606, %v608
      %v613 = vsel %vm611, %v608, %v610
      %v618 = vunpack.c.l.b16 %v479
      %v619 = vunpack.c.h.b16 %v479
      %v620 = vunpack.c.l.b16 %v480
      %v621 = vunpack.c.l.b16 %v481
      %v622 = vunpack.c.h.b16 %v481
      %v623 = vunpack.c.l.b16 %v482
      %v624 = vpack.c.b16 %v621, %v618
      %v625 = vpack.c.b16 %v622, %v619
      %v626 = vpack.c.b16 %v623, %v620
      %627 = vrot.lane.b32.xlu0 %v624, 112
      %v628 = vpop.permute.xlu0 %627
      %629 = vrot.lane.b32.xlu0 %v625, 112
      %v630 = vpop.permute.xlu0 %629
      %631 = vrot.lane.b32.xlu0 %v626, 112
      %v632 = vpop.permute.xlu0 %631
      %vm633 = vcmask 916480
      %v634 = vsel %vm633, %v628, %v630
      %v635 = vsel %vm633, %v630, %v632
      %v638 = vunpack.c.l.b16 %v483
      %v639 = vunpack.c.h.b16 %v483
      %v640 = vunpack.c.l.b16 %v484
      %v641 = vunpack.c.h.b16 %v484
      %v642 = vpack.c.b16 %v640, %v638
      %v643 = vpack.c.b16 %v641, %v639
      %644 = vrot.lane.b32.xlu0 %v642, 111
      %v645 = vpop.permute.xlu0 %644
      %646 = vrot.lane.b32.xlu0 %v643, 111
      %v647 = vpop.permute.xlu0 %646
      %v648 = vsel %vm411, %v645, %v647
      %v653 = vunpack.c.l.b16 %v508
      %v654 = vunpack.c.h.b16 %v508
      %v655 = vunpack.c.l.b16 %v509
      %v656 = vunpack.c.l.b16 %v510
      %v657 = vunpack.c.h.b16 %v510
      %v658 = vunpack.c.l.b16 %v511
      %v659 = vpack.c.b16 %v656, %v653
      %v660 = vpack.c.b16 %v657, %v654
      %v661 = vpack.c.b16 %v658, %v655
      %662 = vrot.lane.b32.xlu0 %v659, 110
      %v663 = vpop.permute.xlu0 %662
      %664 = vrot.lane.b32.xlu0 %v660, 110
      %v665 = vpop.permute.xlu0 %664
      %666 = vrot.lane.b32.xlu0 %v661, 110
      %v667 = vpop.permute.xlu0 %666
      %vm668 = vcmask 900096
      %v669 = vsel %vm668, %v663, %v665
      %v670 = vsel %vm668, %v665, %v667
      %v675 = vunpack.c.l.b16 %v531
      %v676 = vunpack.c.h.b16 %v531
      %v677 = vunpack.c.l.b16 %v532
      %v678 = vunpack.c.l.b16 %v533
      %v679 = vunpack.c.h.b16 %v533
      %v680 = vunpack.c.l.b16 %v534
      %v681 = vpack.c.b16 %v678, %v675
      %v682 = vpack.c.b16 %v679, %v676
      %v683 = vpack.c.b16 %v680, %v677
      %684 = vrot.lane.b32.xlu0 %v681, 96
      %v685 = vpop.permute.xlu0 %684
      %686 = vrot.lane.b32.xlu0 %v682, 96
      %v687 = vpop.permute.xlu0 %686
      %688 = vrot.lane.b32.xlu0 %v683, 96
      %v689 = vpop.permute.xlu0 %688
      %vm690 = vcmask 785408
      %v691 = vsel %vm690, %v685, %v687
      %v692 = vsel %vm690, %v687, %v689
      %v697 = vunpack.c.l.b16 %v485
      %v698 = vunpack.c.h.b16 %v485
      %v699 = vunpack.c.l.b16 %v486
      %v700 = vunpack.c.l.b16 %v487
      %v701 = vunpack.c.h.b16 %v487
      %v702 = vunpack.c.l.b16 %v488
      %v703 = vpack.c.b16 %v700, %v697
      %v704 = vpack.c.b16 %v701, %v698
      %v705 = vpack.c.b16 %v702, %v699
      %706 = vrot.lane.b32.xlu0 %v703, 95
      %v707 = vpop.permute.xlu0 %706
      %708 = vrot.lane.b32.xlu0 %v704, 95
      %v709 = vpop.permute.xlu0 %708
      %710 = vrot.lane.b32.xlu0 %v705, 95
      %v711 = vpop.permute.xlu0 %710
      %vm712 = vcmask 777216
      %v713 = vsel %vm712, %v707, %v709
      %v714 = vsel %vm712, %v709, %v711
      %v719 = vunpack.c.l.b16 %v554
      %v720 = vunpack.c.h.b16 %v554
      %v721 = vunpack.c.l.b16 %v555
      %v722 = vunpack.c.l.b16 %v556
      %v723 = vunpack.c.h.b16 %v556
      %v724 = vunpack.c.l.b16 %v557
      %v725 = vpack.c.b16 %v722, %v719
      %v726 = vpack.c.b16 %v723, %v720
      %v727 = vpack.c.b16 %v724, %v721
      %728 = vrot.lane.b32.xlu0 %v725, 94
      %v729 = vpop.permute.xlu0 %728
      %730 = vrot.lane.b32.xlu0 %v726, 94
      %v731 = vpop.permute.xlu0 %730
      %732 = vrot.lane.b32.xlu0 %v727, 94
      %v733 = vpop.permute.xlu0 %732
      %vm734 = vcmask 769024
      %v735 = vsel %vm734, %v729, %v731
      %v736 = vsel %vm734, %v731, %v733
      %738 = vset.pattern.permute.xlu0 0
      %739 = vperm.xlu0 %738, %v349
      %v740 = vpop.permute.xlu0 %739
      %743 = vset.pattern.permute.xlu0 0
      %744 = vperm.xlu0 %743, %v350
      %v745 = vpop.permute.xlu0 %744
      %748 = vset.pattern.permute.xlu0 0
      %749 = vperm.xlu0 %748, %v351
      %v750 = vpop.permute.xlu0 %749
      %753 = vset.pattern.permute.xlu0 0
      %754 = vperm.xlu0 %753, %v352
      %v755 = vpop.permute.xlu0 %754
      %v761 = vunpack.c.l.b16 %v345
      %v762 = vunpack.c.h.b16 %v345
      %v763 = vunpack.c.l.b16 %v346
      %v764 = vunpack.c.h.b16 %v346
      %v765 = vunpack.c.l.b16 %v347
      %v766 = vunpack.c.h.b16 %v347
      %v767 = vunpack.c.l.b16 %v348
      %v768 = vunpack.c.h.b16 %v348
      %v769 = vpack.c.b16 %v763, %v761
      %v770 = vpack.c.b16 %v764, %v762
      %v771 = vpack.c.b16 %v767, %v765
      %v772 = vpack.c.b16 %v768, %v766
      %775 = vrot.lane.b32.xlu0 %v568, 17
      %v776 = vpop.permute.xlu0 %775
      %777 = vrot.lane.b32.xlu0 %v569, 17
      %v778 = vpop.permute.xlu0 %777
      %779 = vrot.lane.b32.xlu0 %v570, 17
      %v780 = vpop.permute.xlu0 %779
      %781 = vrot.lane.b32.xlu0 %v590, 17
      %v782 = vpop.permute.xlu0 %781
      %783 = vrot.lane.b32.xlu0 %v591, 17
      %v784 = vpop.permute.xlu0 %783
      %785 = vrot.lane.b32.xlu0 %v589, 17
      %v786 = vpop.permute.xlu0 %785
      %787 = vrot.lane.b32.xlu0 %v612, 17
      %v788 = vpop.permute.xlu0 %787
      %789 = vrot.lane.b32.xlu0 %v613, 17
      %v790 = vpop.permute.xlu0 %789
      %791 = vrot.lane.b32.xlu0 %v610, 17
      %v792 = vpop.permute.xlu0 %791
      %793 = vrot.lane.b32.xlu0 %v634, 17
      %v794 = vpop.permute.xlu0 %793
      %795 = vrot.lane.b32.xlu0 %v635, 17
      %v796 = vpop.permute.xlu0 %795
      %797 = vrot.lane.b32.xlu0 %v632, 17
      %v798 = vpop.permute.xlu0 %797
      %799 = vrot.lane.b32.xlu0 %v645, 17
      %v800 = vpop.permute.xlu0 %799
      %801 = vrot.lane.b32.xlu0 %v648, 17
      %v802 = vpop.permute.xlu0 %801
      %803 = vrot.lane.b32.xlu0 %v647, 17
      %v804 = vpop.permute.xlu0 %803
      %805 = vrot.lane.b32.xlu0 %v663, 17
      %v806 = vpop.permute.xlu0 %805
      %807 = vrot.lane.b32.xlu0 %v669, 17
      %v808 = vpop.permute.xlu0 %807
      %809 = vrot.lane.b32.xlu0 %v670, 17
      %v810 = vpop.permute.xlu0 %809
      %811 = vrot.lane.b32.xlu0 %v685, 17
      %v812 = vpop.permute.xlu0 %811
      %813 = vrot.lane.b32.xlu0 %v691, 17
      %v814 = vpop.permute.xlu0 %813
      %815 = vrot.lane.b32.xlu0 %v692, 17
      %v816 = vpop.permute.xlu0 %815
      %817 = vrot.lane.b32.xlu0 %v707, 17
      %v818 = vpop.permute.xlu0 %817
      %819 = vrot.lane.b32.xlu0 %v713, 17
      %v820 = vpop.permute.xlu0 %819
      %821 = vrot.lane.b32.xlu0 %v714, 17
      %v822 = vpop.permute.xlu0 %821
      %823 = vrot.lane.b32.xlu0 %v729, 17
      %v824 = vpop.permute.xlu0 %823
      %825 = vrot.lane.b32.xlu0 %v735, 17
      %v826 = vpop.permute.xlu0 %825
      %827 = vrot.lane.b32.xlu0 %v736, 17
      %v828 = vpop.permute.xlu0 %827
      %v829 = vsel %vm538, %v776, %v778
      %v830 = vsel %vm538, %v778, %v780
      %v831 = vsel %vm538, %v782, %v784
      %v832 = vsel %vm538, %v784, %v786
      %v833 = vsel %vm538, %v788, %v790
      %v834 = vsel %vm538, %v790, %v792
      %v835 = vsel %vm538, %v794, %v796
      %v836 = vsel %vm538, %v796, %v798
      %v837 = vsel %vm538, %v800, %v802
      %v838 = vsel %vm538, %v802, %v804
      %v839 = vsel %vm538, %v806, %v808
      %v840 = vsel %vm538, %v808, %v810
      %v841 = vsel %vm538, %v812, %v814
      %v842 = vsel %vm538, %v814, %v816
      %v843 = vsel %vm538, %v818, %v820
      %v844 = vsel %vm538, %v820, %v822
      %v845 = vsel %vm538, %v824, %v826
      %v846 = vsel %vm538, %v826, %v828
      %vm865 = vcmask 130048
      %v867 = vsel %vm865, %v770, 0
      %v870 = vsel %vm865, %v772, 0
      %872 = vmatpush.bf16.msra.mxu0 %v843
      %873 = vmatpush.bf16.msra.mxu0 %v841
      %874 = vmatpush.bf16.msra.mxu0 %v839
      %875 = vmatpush.bf16.msra.mxu0 %v837
      %876 = vmatpush.bf16.msra.mxu0 %v835
      %877 = vmatpush.bf16.msra.mxu0 %v833
      %878 = vmatpush.bf16.msra.mxu0 %v831
      %879 = vmatpush.bf16.msra.mxu0 %v829
      %880 = vmatmul.bf16.gmra.mxu0 %v769
      %v881 = vpop.f32.mrf.mxu0
      %v882 = vadd.f32 %v740, %v881
      %v883 = vpop.f32.mrf.mxu0
      %v884 = vadd.f32 %v745, %v883
      %885 = vmatmul.bf16.gmra.mxu0 %v771
      %v886 = vpop.f32.mrf.mxu0
      %v887 = vadd.f32 %v750, %v886
      %v888 = vpop.f32.mrf.mxu0
      %v889 = vadd.f32 %v755, %v888
      %890 = vdwg.mxu0
      %891 = vmatpush.bf16.msra.mxu0 0
      %892 = vmatpush.bf16.msra.mxu0 0
      %893 = vmatpush.bf16.msra.mxu0 0
      %894 = vmatpush.bf16.msra.mxu0 0
      %895 = vmatpush.bf16.msra.mxu0 0
      %896 = vmatpush.bf16.msra.mxu0 0
      %897 = vmatpush.bf16.msra.mxu0 0
      %898 = vmatpush.bf16.msra.mxu0 %v845
      %899 = vmatmul.bf16.gmra.mxu0 %v867
      %v900 = vpop.f32.mrf.mxu0
      %v901 = vadd.f32 %v882, %v900
      %v902 = vpop.f32.mrf.mxu0
      %v903 = vadd.f32 %v884, %v902
      %904 = vmatmul.bf16.gmra.mxu0 %v870
      %v905 = vpop.f32.mrf.mxu0
      %v906 = vadd.f32 %v887, %v905
      %v907 = vpop.f32.mrf.mxu0
      %v908 = vadd.f32 %v889, %v907
      %909 = vdwg.mxu0
      %910 = vmatpush.bf16.msra.mxu0 %v844
      %911 = vmatpush.bf16.msra.mxu0 %v842
      %912 = vmatpush.bf16.msra.mxu0 %v840
      %913 = vmatpush.bf16.msra.mxu0 %v838
      %914 = vmatpush.bf16.msra.mxu0 %v836
      %915 = vmatpush.bf16.msra.mxu0 %v834
      %916 = vmatpush.bf16.msra.mxu0 %v832
      %917 = vmatpush.bf16.msra.mxu0 %v830
      %918 = vmatmul.bf16.gmra.mxu0 %v769
      %v919 = vpop.f32.mrf.mxu0
      %v920 = vadd.f32 %v740, %v919
      %v921 = vpop.f32.mrf.mxu0
      %v922 = vadd.f32 %v745, %v921
      %923 = vmatmul.bf16.gmra.mxu0 %v771
      %v924 = vpop.f32.mrf.mxu0
      %v925 = vadd.f32 %v750, %v924
      %v926 = vpop.f32.mrf.mxu0
      %v927 = vadd.f32 %v755, %v926
      %928 = vdwg.mxu0
      %929 = vmatpush.bf16.msra.mxu0 0
      %930 = vmatpush.bf16.msra.mxu0 0
      %931 = vmatpush.bf16.msra.mxu0 0
      %932 = vmatpush.bf16.msra.mxu0 0
      %933 = vmatpush.bf16.msra.mxu0 0
      %934 = vmatpush.bf16.msra.mxu0 0
      %935 = vmatpush.bf16.msra.mxu0 0
      %936 = vmatpush.bf16.msra.mxu0 %v846
      %937 = vmatmul.bf16.gmra.mxu0 %v867
      %v938 = vpop.f32.mrf.mxu0
      %v939 = vadd.f32 %v920, %v938
      %v940 = vpop.f32.mrf.mxu0
      %v941 = vadd.f32 %v922, %v940
      %942 = vmatmul.bf16.gmra.mxu0 %v870
      %v943 = vpop.f32.mrf.mxu0
      %v944 = vadd.f32 %v925, %v943
      %v945 = vpop.f32.mrf.mxu0
      %v946 = vadd.f32 %v927, %v945
      %947 = vdwg.mxu0
      %v948 = vmax.f32 %v901, 0.0
      %v949 = vmax.f32 %v939, 0.0
      %v950 = vmax.f32 %v903, 0.0
      %v951 = vmax.f32 %v941, 0.0
      %v952 = vmax.f32 %v906, 0.0
      %v953 = vmax.f32 %v944, 0.0
      %v954 = vmax.f32 %v908, 0.0
      %v955 = vmax.f32 %v946, 0.0
      %v956 = vpack.c.bf16 %v949, %v948
      %v957 = vpack.c.bf16 %v951, %v950
      %v958 = vpack.c.bf16 %v953, %v952
      %v959 = vpack.c.bf16 %v955, %v954
      %960 = vst [vmem:[#allocation2 + $0x4] sm:$0xff] %v956
      %961 = vst [vmem:[#allocation2 + $0x14] sm:$0xff] %v957
      %962 = vst [vmem:[#allocation2 + $0x24] sm:$0xff] %v958
      %963 = vst [vmem:[#allocation2 + $0x34] sm:$0xff] %v959
      %v964 = vld [vmem:[#allocation2] sm:$0xff]
      %v965 = vld [vmem:[#allocation2 + $0x8] sm:$0xf]
      %v966 = vld [vmem:[#allocation2 + $0x10] sm:$0xff]
      %v967 = vld [vmem:[#allocation2 + $0x18] sm:$0xf]
      %v968 = vld [vmem:[#allocation2 + $0x20] sm:$0xff]
      %v969 = vld [vmem:[#allocation2 + $0x28] sm:$0xf]
      %v970 = vld [vmem:[#allocation2 + $0x30] sm:$0xff]
      %v971 = vld [vmem:[#allocation2 + $0x38] sm:$0xf]
      %v972 = vsel %vm419, %v964, 0
      %v973 = vsel %vm426, %v965, 0
      %v974 = vsel %vm419, %v966, 0
      %v975 = vsel %vm426, %v967, 0
      %v976 = vsel %vm419, %v968, 0
      %v977 = vsel %vm426, %v969, 0
      %v978 = vsel %vm419, %v970, 0
      %v979 = vsel %vm426, %v971, 0
      %v980 = vsel %vm448, %v964, 0
      %v981 = vsel %vm455, %v965, 0
      %v982 = vsel %vm448, %v966, 0
      %v983 = vsel %vm455, %v967, 0
      %v984 = vsel %vm448, %v968, 0
      %v985 = vsel %vm455, %v969, 0
      %v986 = vsel %vm448, %v970, 0
      %v987 = vsel %vm455, %v971, 0
      %v988 = vsel %vm471, %v964, 0
      %v989 = vsel %vm478, %v965, 0
      %v990 = vsel %vm471, %v966, 0
      %v991 = vsel %vm478, %v967, 0
      %v992 = vsel %vm471, %v968, 0
      %v993 = vsel %vm478, %v969, 0
      %v994 = vsel %vm471, %v970, 0
      %v995 = vsel %vm478, %v971, 0
      %v996 = vld [vmem:[#allocation2 + $0x4] sm:$0xff]
      %v997 = vld [vmem:[#allocation2 + $0x14] sm:$0xff]
      %v998 = vld [vmem:[#allocation2 + $0x24] sm:$0xff]
      %v999 = vld [vmem:[#allocation2 + $0x34] sm:$0xff]
      %v1000 = vld [vmem:[#allocation2 + $0x4] sm:$0xff]
      %v1001 = vld [vmem:[#allocation2 + $0xc] sm:$0xf]
      %v1002 = vld [vmem:[#allocation2 + $0x14] sm:$0xff]
      %v1003 = vld [vmem:[#allocation2 + $0x1c] sm:$0xf]
      %v1004 = vld [vmem:[#allocation2 + $0x24] sm:$0xff]
      %v1005 = vld [vmem:[#allocation2 + $0x2c] sm:$0xf]
      %v1006 = vld [vmem:[#allocation2 + $0x34] sm:$0xff]
      %v1007 = vld [vmem:[#allocation2 + $0x3c] sm:$0xf]
      %v1008 = vsel %vm500, %v1000, 0
      %v1009 = vsel %vm507, %v1001, 0
      %v1010 = vsel %vm500, %v1002, 0
      %v1011 = vsel %vm507, %v1003, 0
      %v1012 = vsel %vm500, %v1004, 0
      %v1013 = vsel %vm507, %v1005, 0
      %v1014 = vsel %vm500, %v1006, 0
      %v1015 = vsel %vm507, %v1007, 0
      %v1016 = vsel %vm523, %v1000, 0
      %v1017 = vsel %vm530, %v1001, 0
      %v1018 = vsel %vm523, %v1002, 0
      %v1019 = vsel %vm530, %v1003, 0
      %v1020 = vsel %vm523, %v1004, 0
      %v1021 = vsel %vm530, %v1005, 0
      %v1022 = vsel %vm523, %v1006, 0
      %v1023 = vsel %vm530, %v1007, 0
      %v1024 = vsel %vm546, %v1000, 0
      %v1025 = vsel %vm553, %v1001, 0
      %v1026 = vsel %vm546, %v1002, 0
      %v1027 = vsel %vm553, %v1003, 0
      %v1028 = vsel %vm546, %v1004, 0
      %v1029 = vsel %vm553, %v1005, 0
      %v1030 = vsel %vm546, %v1006, 0
      %v1031 = vsel %vm553, %v1007, 0
      %v1040 = vunpack.c.l.b16 %v972
      %v1041 = vunpack.c.h.b16 %v972
      %v1042 = vunpack.c.l.b16 %v973
      %v1043 = vunpack.c.l.b16 %v974
      %v1044 = vunpack.c.h.b16 %v974
      %v1045 = vunpack.c.l.b16 %v975
      %v1046 = vunpack.c.l.b16 %v976
      %v1047 = vunpack.c.h.b16 %v976
      %v1048 = vunpack.c.l.b16 %v977
      %v1049 = vunpack.c.l.b16 %v978
      %v1050 = vunpack.c.h.b16 %v978
      %v1051 = vunpack.c.l.b16 %v979
      %v1052 = vpack.c.b16 %v1043, %v1040
      %v1053 = vpack.c.b16 %v1044, %v1041
      %v1054 = vpack.c.b16 %v1045, %v1042
      %v1055 = vpack.c.b16 %v1049, %v1046
      %v1056 = vpack.c.b16 %v1050, %v1047
      %v1057 = vpack.c.b16 %v1051, %v1048
      %v1066 = vunpack.c.l.b16 %v964
      %v1067 = vunpack.c.h.b16 %v964
      %v1068 = vunpack.c.l.b16 %v965
      %v1069 = vunpack.c.l.b16 %v966
      %v1070 = vunpack.c.h.b16 %v966
      %v1071 = vunpack.c.l.b16 %v967
      %v1072 = vunpack.c.l.b16 %v968
      %v1073 = vunpack.c.h.b16 %v968
      %v1074 = vunpack.c.l.b16 %v969
      %v1075 = vunpack.c.l.b16 %v970
      %v1076 = vunpack.c.h.b16 %v970
      %v1077 = vunpack.c.l.b16 %v971
      %v1078 = vpack.c.b16 %v1069, %v1066
      %v1079 = vpack.c.b16 %v1070, %v1067
      %v1080 = vpack.c.b16 %v1071, %v1068
      %v1081 = vpack.c.b16 %v1075, %v1072
      %v1082 = vpack.c.b16 %v1076, %v1073
      %v1083 = vpack.c.b16 %v1077, %v1074
      %1084 = vrot.lane.b32.xlu0 %v1078, 127
      %v1085 = vpop.permute.xlu0 %1084
      %1086 = vrot.lane.b32.xlu0 %v1079, 127
      %v1087 = vpop.permute.xlu0 %1086
      %1088 = vrot.lane.b32.xlu0 %v1080, 127
      %v1089 = vpop.permute.xlu0 %1088
      %1090 = vrot.lane.b32.xlu0 %v1081, 127
      %v1091 = vpop.permute.xlu0 %1090
      %1092 = vrot.lane.b32.xlu0 %v1082, 127
      %v1093 = vpop.permute.xlu0 %1092
      %1094 = vrot.lane.b32.xlu0 %v1083, 127
      %v1095 = vpop.permute.xlu0 %1094
      %v1096 = vsel %vm463, %v1085, %v1087
      %v1097 = vsel %vm463, %v1087, %v1089
      %v1098 = vsel %vm463, %v1091, %v1093
      %v1099 = vsel %vm463, %v1093, %v1095
      %v1108 = vunpack.c.l.b16 %v980
      %v1109 = vunpack.c.h.b16 %v980
      %v1110 = vunpack.c.l.b16 %v981
      %v1111 = vunpack.c.l.b16 %v982
      %v1112 = vunpack.c.h.b16 %v982
      %v1113 = vunpack.c.l.b16 %v983
      %v1114 = vunpack.c.l.b16 %v984
      %v1115 = vunpack.c.h.b16 %v984
      %v1116 = vunpack.c.l.b16 %v985
      %v1117 = vunpack.c.l.b16 %v986
      %v1118 = vunpack.c.h.b16 %v986
      %v1119 = vunpack.c.l.b16 %v987
      %v1120 = vpack.c.b16 %v1111, %v1108
      %v1121 = vpack.c.b16 %v1112, %v1109
      %v1122 = vpack.c.b16 %v1113, %v1110
      %v1123 = vpack.c.b16 %v1117, %v1114
      %v1124 = vpack.c.b16 %v1118, %v1115
      %v1125 = vpack.c.b16 %v1119, %v1116
      %1126 = vrot.lane.b32.xlu0 %v1120, 126
      %v1127 = vpop.permute.xlu0 %1126
      %1128 = vrot.lane.b32.xlu0 %v1121, 126
      %v1129 = vpop.permute.xlu0 %1128
      %1130 = vrot.lane.b32.xlu0 %v1122, 126
      %v1131 = vpop.permute.xlu0 %1130
      %1132 = vrot.lane.b32.xlu0 %v1123, 126
      %v1133 = vpop.permute.xlu0 %1132
      %1134 = vrot.lane.b32.xlu0 %v1124, 126
      %v1135 = vpop.permute.xlu0 %1134
      %1136 = vrot.lane.b32.xlu0 %v1125, 126
      %v1137 = vpop.permute.xlu0 %1136
      %v1138 = vsel %vm611, %v1127, %v1129
      %v1139 = vsel %vm611, %v1129, %v1131
      %v1140 = vsel %vm611, %v1133, %v1135
      %v1141 = vsel %vm611, %v1135, %v1137
      %v1150 = vunpack.c.l.b16 %v988
      %v1151 = vunpack.c.h.b16 %v988
      %v1152 = vunpack.c.l.b16 %v989
      %v1153 = vunpack.c.l.b16 %v990
      %v1154 = vunpack.c.h.b16 %v990
      %v1155 = vunpack.c.l.b16 %v991
      %v1156 = vunpack.c.l.b16 %v992
      %v1157 = vunpack.c.h.b16 %v992
      %v1158 = vunpack.c.l.b16 %v993
      %v1159 = vunpack.c.l.b16 %v994
      %v1160 = vunpack.c.h.b16 %v994
      %v1161 = vunpack.c.l.b16 %v995
      %v1162 = vpack.c.b16 %v1153, %v1150
      %v1163 = vpack.c.b16 %v1154, %v1151
      %v1164 = vpack.c.b16 %v1155, %v1152
      %v1165 = vpack.c.b16 %v1159, %v1156
      %v1166 = vpack.c.b16 %v1160, %v1157
      %v1167 = vpack.c.b16 %v1161, %v1158
      %1168 = vrot.lane.b32.xlu0 %v1162, 112
      %v1169 = vpop.permute.xlu0 %1168
      %1170 = vrot.lane.b32.xlu0 %v1163, 112
      %v1171 = vpop.permute.xlu0 %1170
      %1172 = vrot.lane.b32.xlu0 %v1164, 112
      %v1173 = vpop.permute.xlu0 %1172
      %1174 = vrot.lane.b32.xlu0 %v1165, 112
      %v1175 = vpop.permute.xlu0 %1174
      %1176 = vrot.lane.b32.xlu0 %v1166, 112
      %v1177 = vpop.permute.xlu0 %1176
      %1178 = vrot.lane.b32.xlu0 %v1167, 112
      %v1179 = vpop.permute.xlu0 %1178
      %v1180 = vsel %vm633, %v1169, %v1171
      %v1181 = vsel %vm633, %v1171, %v1173
      %v1182 = vsel %vm633, %v1175, %v1177
      %v1183 = vsel %vm633, %v1177, %v1179
      %v1188 = vunpack.c.l.b16 %v996
      %v1189 = vunpack.c.h.b16 %v996
      %v1190 = vunpack.c.l.b16 %v997
      %v1191 = vunpack.c.h.b16 %v997
      %v1192 = vunpack.c.l.b16 %v998
      %v1193 = vunpack.c.h.b16 %v998
      %v1194 = vunpack.c.l.b16 %v999
      %v1195 = vunpack.c.h.b16 %v999
      %v1196 = vpack.c.b16 %v1190, %v1188
      %v1197 = vpack.c.b16 %v1191, %v1189
      %v1198 = vpack.c.b16 %v1194, %v1192
      %v1199 = vpack.c.b16 %v1195, %v1193
      %1200 = vrot.lane.b32.xlu0 %v1196, 111
      %v1201 = vpop.permute.xlu0 %1200
      %1202 = vrot.lane.b32.xlu0 %v1197, 111
      %v1203 = vpop.permute.xlu0 %1202
      %1204 = vrot.lane.b32.xlu0 %v1198, 111
      %v1205 = vpop.permute.xlu0 %1204
      %1206 = vrot.lane.b32.xlu0 %v1199, 111
      %v1207 = vpop.permute.xlu0 %1206
      %v1208 = vsel %vm411, %v1201, %v1203
      %v1209 = vsel %vm411, %v1205, %v1207
      %v1218 = vunpack.c.l.b16 %v1008
      %v1219 = vunpack.c.h.b16 %v1008
      %v1220 = vunpack.c.l.b16 %v1009
      %v1221 = vunpack.c.l.b16 %v1010
      %v1222 = vunpack.c.h.b16 %v1010
      %v1223 = vunpack.c.l.b16 %v1011
      %v1224 = vunpack.c.l.b16 %v1012
      %v1225 = vunpack.c.h.b16 %v1012
      %v1226 = vunpack.c.l.b16 %v1013
      %v1227 = vunpack.c.l.b16 %v1014
      %v1228 = vunpack.c.h.b16 %v1014
      %v1229 = vunpack.c.l.b16 %v1015
      %v1230 = vpack.c.b16 %v1221, %v1218
      %v1231 = vpack.c.b16 %v1222, %v1219
      %v1232 = vpack.c.b16 %v1223, %v1220
      %v1233 = vpack.c.b16 %v1227, %v1224
      %v1234 = vpack.c.b16 %v1228, %v1225
      %v1235 = vpack.c.b16 %v1229, %v1226
      %1236 = vrot.lane.b32.xlu0 %v1230, 110
      %v1237 = vpop.permute.xlu0 %1236
      %1238 = vrot.lane.b32.xlu0 %v1231, 110
      %v1239 = vpop.permute.xlu0 %1238
      %1240 = vrot.lane.b32.xlu0 %v1232, 110
      %v1241 = vpop.permute.xlu0 %1240
      %1242 = vrot.lane.b32.xlu0 %v1233, 110
      %v1243 = vpop.permute.xlu0 %1242
      %1244 = vrot.lane.b32.xlu0 %v1234, 110
      %v1245 = vpop.permute.xlu0 %1244
      %1246 = vrot.lane.b32.xlu0 %v1235, 110
      %v1247 = vpop.permute.xlu0 %1246
      %v1248 = vsel %vm668, %v1237, %v1239
      %v1249 = vsel %vm668, %v1239, %v1241
      %v1250 = vsel %vm668, %v1243, %v1245
      %v1251 = vsel %vm668, %v1245, %v1247
      %v1260 = vunpack.c.l.b16 %v1016
      %v1261 = vunpack.c.h.b16 %v1016
      %v1262 = vunpack.c.l.b16 %v1017
      %v1263 = vunpack.c.l.b16 %v1018
      %v1264 = vunpack.c.h.b16 %v1018
      %v1265 = vunpack.c.l.b16 %v1019
      %v1266 = vunpack.c.l.b16 %v1020
      %v1267 = vunpack.c.h.b16 %v1020
      %v1268 = vunpack.c.l.b16 %v1021
      %v1269 = vunpack.c.l.b16 %v1022
      %v1270 = vunpack.c.h.b16 %v1022
      %v1271 = vunpack.c.l.b16 %v1023
      %v1272 = vpack.c.b16 %v1263, %v1260
      %v1273 = vpack.c.b16 %v1264, %v1261
      %v1274 = vpack.c.b16 %v1265, %v1262
      %v1275 = vpack.c.b16 %v1269, %v1266
      %v1276 = vpack.c.b16 %v1270, %v1267
      %v1277 = vpack.c.b16 %v1271, %v1268
      %1278 = vrot.lane.b32.xlu0 %v1272, 96
      %v1279 = vpop.permute.xlu0 %1278
      %1280 = vrot.lane.b32.xlu0 %v1273, 96
      %v1281 = vpop.permute.xlu0 %1280
      %1282 = vrot.lane.b32.xlu0 %v1274, 96
      %v1283 = vpop.permute.xlu0 %1282
      %1284 = vrot.lane.b32.xlu0 %v1275, 96
      %v1285 = vpop.permute.xlu0 %1284
      %1286 = vrot.lane.b32.xlu0 %v1276, 96
      %v1287 = vpop.permute.xlu0 %1286
      %1288 = vrot.lane.b32.xlu0 %v1277, 96
      %v1289 = vpop.permute.xlu0 %1288
      %v1290 = vsel %vm690, %v1279, %v1281
      %v1291 = vsel %vm690, %v1281, %v1283
      %v1292 = vsel %vm690, %v1285, %v1287
      %v1293 = vsel %vm690, %v1287, %v1289
      %v1302 = vunpack.c.l.b16 %v1000
      %v1303 = vunpack.c.h.b16 %v1000
      %v1304 = vunpack.c.l.b16 %v1001
      %v1305 = vunpack.c.l.b16 %v1002
      %v1306 = vunpack.c.h.b16 %v1002
      %v1307 = vunpack.c.l.b16 %v1003
      %v1308 = vunpack.c.l.b16 %v1004
      %v1309 = vunpack.c.h.b16 %v1004
      %v1310 = vunpack.c.l.b16 %v1005
      %v1311 = vunpack.c.l.b16 %v1006
      %v1312 = vunpack.c.h.b16 %v1006
      %v1313 = vunpack.c.l.b16 %v1007
      %v1314 = vpack.c.b16 %v1305, %v1302
      %v1315 = vpack.c.b16 %v1306, %v1303
      %v1316 = vpack.c.b16 %v1307, %v1304
      %v1317 = vpack.c.b16 %v1311, %v1308
      %v1318 = vpack.c.b16 %v1312, %v1309
      %v1319 = vpack.c.b16 %v1313, %v1310
      %1320 = vrot.lane.b32.xlu0 %v1314, 95
      %v1321 = vpop.permute.xlu0 %1320
      %1322 = vrot.lane.b32.xlu0 %v1315, 95
      %v1323 = vpop.permute.xlu0 %1322
      %1324 = vrot.lane.b32.xlu0 %v1316, 95
      %v1325 = vpop.permute.xlu0 %1324
      %1326 = vrot.lane.b32.xlu0 %v1317, 95
      %v1327 = vpop.permute.xlu0 %1326
      %1328 = vrot.lane.b32.xlu0 %v1318, 95
      %v1329 = vpop.permute.xlu0 %1328
      %1330 = vrot.lane.b32.xlu0 %v1319, 95
      %v1331 = vpop.permute.xlu0 %1330
      %v1332 = vsel %vm712, %v1321, %v1323
      %v1333 = vsel %vm712, %v1323, %v1325
      %v1334 = vsel %vm712, %v1327, %v1329
      %v1335 = vsel %vm712, %v1329, %v1331
      %v1344 = vunpack.c.l.b16 %v1024
      %v1345 = vunpack.c.h.b16 %v1024
      %v1346 = vunpack.c.l.b16 %v1025
      %v1347 = vunpack.c.l.b16 %v1026
      %v1348 = vunpack.c.h.b16 %v1026
      %v1349 = vunpack.c.l.b16 %v1027
      %v1350 = vunpack.c.l.b16 %v1028
      %v1351 = vunpack.c.h.b16 %v1028
      %v1352 = vunpack.c.l.b16 %v1029
      %v1353 = vunpack.c.l.b16 %v1030
      %v1354 = vunpack.c.h.b16 %v1030
      %v1355 = vunpack.c.l.b16 %v1031
      %v1356 = vpack.c.b16 %v1347, %v1344
      %v1357 = vpack.c.b16 %v1348, %v1345
      %v1358 = vpack.c.b16 %v1349, %v1346
      %v1359 = vpack.c.b16 %v1353, %v1350
      %v1360 = vpack.c.b16 %v1354, %v1351
      %v1361 = vpack.c.b16 %v1355, %v1352
      %1362 = vrot.lane.b32.xlu0 %v1356, 94
      %v1363 = vpop.permute.xlu0 %1362
      %1364 = vrot.lane.b32.xlu0 %v1357, 94
      %v1365 = vpop.permute.xlu0 %1364
      %1366 = vrot.lane.b32.xlu0 %v1358, 94
      %v1367 = vpop.permute.xlu0 %1366
      %1368 = vrot.lane.b32.xlu0 %v1359, 94
      %v1369 = vpop.permute.xlu0 %1368
      %1370 = vrot.lane.b32.xlu0 %v1360, 94
      %v1371 = vpop.permute.xlu0 %1370
      %1372 = vrot.lane.b32.xlu0 %v1361, 94
      %v1373 = vpop.permute.xlu0 %1372
      %v1374 = vsel %vm734, %v1363, %v1365
      %v1375 = vsel %vm734, %v1365, %v1367
      %v1376 = vsel %vm734, %v1369, %v1371
      %v1377 = vsel %vm734, %v1371, %v1373
      %1379 = vset.pattern.permute.xlu0 0
      %1380 = vperm.xlu0 %1379, %v361
      %v1381 = vpop.permute.xlu0 %1380
      %1384 = vset.pattern.permute.xlu0 0
      %1385 = vperm.xlu0 %1384, %v362
      %v1386 = vpop.permute.xlu0 %1385
      %1389 = vset.pattern.permute.xlu0 0
      %1390 = vperm.xlu0 %1389, %v363
      %v1391 = vpop.permute.xlu0 %1390
      %1394 = vset.pattern.permute.xlu0 0
      %1395 = vperm.xlu0 %1394, %v364
      %v1396 = vpop.permute.xlu0 %1395
      %v1406 = vunpack.c.l.b16 %v353
      %v1407 = vunpack.c.h.b16 %v353
      %v1408 = vunpack.c.l.b16 %v354
      %v1409 = vunpack.c.l.b16 %v355
      %v1410 = vunpack.c.h.b16 %v355
      %v1411 = vunpack.c.l.b16 %v356
      %v1412 = vunpack.c.l.b16 %v357
      %v1413 = vunpack.c.h.b16 %v357
      %v1414 = vunpack.c.l.b16 %v358
      %v1415 = vunpack.c.l.b16 %v359
      %v1416 = vunpack.c.h.b16 %v359
      %v1417 = vunpack.c.l.b16 %v360
      %v1418 = vpack.c.b16 %v1409, %v1406
      %v1419 = vpack.c.b16 %v1410, %v1407
      %v1420 = vpack.c.b16 %v1411, %v1408
      %v1421 = vpack.c.b16 %v1415, %v1412
      %v1422 = vpack.c.b16 %v1416, %v1413
      %v1423 = vpack.c.b16 %v1417, %v1414
      %1428 = vrot.lane.b32.xlu0 %v1052, 17
      %v1429 = vpop.permute.xlu0 %1428
      %1430 = vrot.lane.b32.xlu0 %v1053, 17
      %v1431 = vpop.permute.xlu0 %1430
      %1432 = vrot.lane.b32.xlu0 %v1054, 17
      %v1433 = vpop.permute.xlu0 %1432
      %1434 = vrot.lane.b32.xlu0 %v1055, 17
      %v1435 = vpop.permute.xlu0 %1434
      %1436 = vrot.lane.b32.xlu0 %v1056, 17
      %v1437 = vpop.permute.xlu0 %1436
      %1438 = vrot.lane.b32.xlu0 %v1057, 17
      %v1439 = vpop.permute.xlu0 %1438
      %1440 = vrot.lane.b32.xlu0 %v1096, 17
      %v1441 = vpop.permute.xlu0 %1440
      %1442 = vrot.lane.b32.xlu0 %v1097, 17
      %v1443 = vpop.permute.xlu0 %1442
      %1444 = vrot.lane.b32.xlu0 %v1089, 17
      %v1445 = vpop.permute.xlu0 %1444
      %1446 = vrot.lane.b32.xlu0 %v1098, 17
      %v1447 = vpop.permute.xlu0 %1446
      %1448 = vrot.lane.b32.xlu0 %v1099, 17
      %v1449 = vpop.permute.xlu0 %1448
      %1450 = vrot.lane.b32.xlu0 %v1095, 17
      %v1451 = vpop.permute.xlu0 %1450
      %1452 = vrot.lane.b32.xlu0 %v1138, 17
      %v1453 = vpop.permute.xlu0 %1452
      %1454 = vrot.lane.b32.xlu0 %v1139, 17
      %v1455 = vpop.permute.xlu0 %1454
      %1456 = vrot.lane.b32.xlu0 %v1131, 17
      %v1457 = vpop.permute.xlu0 %1456
      %1458 = vrot.lane.b32.xlu0 %v1140, 17
      %v1459 = vpop.permute.xlu0 %1458
      %1460 = vrot.lane.b32.xlu0 %v1141, 17
      %v1461 = vpop.permute.xlu0 %1460
      %1462 = vrot.lane.b32.xlu0 %v1137, 17
      %v1463 = vpop.permute.xlu0 %1462
      %1464 = vrot.lane.b32.xlu0 %v1180, 17
      %v1465 = vpop.permute.xlu0 %1464
      %1466 = vrot.lane.b32.xlu0 %v1181, 17
      %v1467 = vpop.permute.xlu0 %1466
      %1468 = vrot.lane.b32.xlu0 %v1173, 17
      %v1469 = vpop.permute.xlu0 %1468
      %1470 = vrot.lane.b32.xlu0 %v1182, 17
      %v1471 = vpop.permute.xlu0 %1470
      %1472 = vrot.lane.b32.xlu0 %v1183, 17
      %v1473 = vpop.permute.xlu0 %1472
      %1474 = vrot.lane.b32.xlu0 %v1179, 17
      %v1475 = vpop.permute.xlu0 %1474
      %1476 = vrot.lane.b32.xlu0 %v1201, 17
      %v1477 = vpop.permute.xlu0 %1476
      %1478 = vrot.lane.b32.xlu0 %v1208, 17
      %v1479 = vpop.permute.xlu0 %1478
      %1480 = vrot.lane.b32.xlu0 %v1203, 17
      %v1481 = vpop.permute.xlu0 %1480
      %1482 = vrot.lane.b32.xlu0 %v1205, 17
      %v1483 = vpop.permute.xlu0 %1482
      %1484 = vrot.lane.b32.xlu0 %v1209, 17
      %v1485 = vpop.permute.xlu0 %1484
      %1486 = vrot.lane.b32.xlu0 %v1207, 17
      %v1487 = vpop.permute.xlu0 %1486
      %1488 = vrot.lane.b32.xlu0 %v1237, 17
      %v1489 = vpop.permute.xlu0 %1488
      %1490 = vrot.lane.b32.xlu0 %v1248, 17
      %v1491 = vpop.permute.xlu0 %1490
      %1492 = vrot.lane.b32.xlu0 %v1249, 17
      %v1493 = vpop.permute.xlu0 %1492
      %1494 = vrot.lane.b32.xlu0 %v1243, 17
      %v1495 = vpop.permute.xlu0 %1494
      %1496 = vrot.lane.b32.xlu0 %v1250, 17
      %v1497 = vpop.permute.xlu0 %1496
      %1498 = vrot.lane.b32.xlu0 %v1251, 17
      %v1499 = vpop.permute.xlu0 %1498
      %1500 = vrot.lane.b32.xlu0 %v1279, 17
      %v1501 = vpop.permute.xlu0 %1500
      %1502 = vrot.lane.b32.xlu0 %v1290, 17
      %v1503 = vpop.permute.xlu0 %1502
      %1504 = vrot.lane.b32.xlu0 %v1291, 17
      %v1505 = vpop.permute.xlu0 %1504
      %1506 = vrot.lane.b32.xlu0 %v1285, 17
      %v1507 = vpop.permute.xlu0 %1506
      %1508 = vrot.lane.b32.xlu0 %v1292, 17
      %v1509 = vpop.permute.xlu0 %1508
      %1510 = vrot.lane.b32.xlu0 %v1293, 17
      %v1511 = vpop.permute.xlu0 %1510
      %1512 = vrot.lane.b32.xlu0 %v1321, 17
      %v1513 = vpop.permute.xlu0 %1512
      %1514 = vrot.lane.b32.xlu0 %v1332, 17
      %v1515 = vpop.permute.xlu0 %1514
      %1516 = vrot.lane.b32.xlu0 %v1333, 17
      %v1517 = vpop.permute.xlu0 %1516
      %1518 = vrot.lane.b32.xlu0 %v1327, 17
      %v1519 = vpop.permute.xlu0 %1518
      %1520 = vrot.lane.b32.xlu0 %v1334, 17
      %v1521 = vpop.permute.xlu0 %1520
      %1522 = vrot.lane.b32.xlu0 %v1335, 17
      %v1523 = vpop.permute.xlu0 %1522
      %1524 = vrot.lane.b32.xlu0 %v1363, 17
      %v1525 = vpop.permute.xlu0 %1524
      %1526 = vrot.lane.b32.xlu0 %v1374, 17
      %v1527 = vpop.permute.xlu0 %1526
      %1528 = vrot.lane.b32.xlu0 %v1375, 17
      %v1529 = vpop.permute.xlu0 %1528
      %1530 = vrot.lane.b32.xlu0 %v1369, 17
      %v1531 = vpop.permute.xlu0 %1530
      %1532 = vrot.lane.b32.xlu0 %v1376, 17
      %v1533 = vpop.permute.xlu0 %1532
      %1534 = vrot.lane.b32.xlu0 %v1377, 17
      %v1535 = vpop.permute.xlu0 %1534
      %v1536 = vsel %vm538, %v1429, %v1431
      %v1537 = vsel %vm538, %v1431, %v1433
      %v1538 = vsel %vm538, %v1435, %v1437
      %v1539 = vsel %vm538, %v1437, %v1439
      %v1540 = vsel %vm538, %v1441, %v1443
      %v1541 = vsel %vm538, %v1443, %v1445
      %v1542 = vsel %vm538, %v1447, %v1449
      %v1543 = vsel %vm538, %v1449, %v1451
      %v1544 = vsel %vm538, %v1453, %v1455
      %v1545 = vsel %vm538, %v1455, %v1457
      %v1546 = vsel %vm538, %v1459, %v1461
      %v1547 = vsel %vm538, %v1461, %v1463
      %v1548 = vsel %vm538, %v1465, %v1467
      %v1549 = vsel %vm538, %v1467, %v1469
      %v1550 = vsel %vm538, %v1471, %v1473
      %v1551 = vsel %vm538, %v1473, %v1475
      %v1552 = vsel %vm538, %v1477, %v1479
      %v1553 = vsel %vm538, %v1479, %v1481
      %v1554 = vsel %vm538, %v1483, %v1485
      %v1555 = vsel %vm538, %v1485, %v1487
      %v1556 = vsel %vm538, %v1489, %v1491
      %v1557 = vsel %vm538, %v1491, %v1493
      %v1558 = vsel %vm538, %v1495, %v1497
      %v1559 = vsel %vm538, %v1497, %v1499
      %v1560 = vsel %vm538, %v1501, %v1503
      %v1561 = vsel %vm538, %v1503, %v1505
      %v1562 = vsel %vm538, %v1507, %v1509
      %v1563 = vsel %vm538, %v1509, %v1511
      %v1564 = vsel %vm538, %v1513, %v1515
      %v1565 = vsel %vm538, %v1515, %v1517
      %v1566 = vsel %vm538, %v1519, %v1521
      %v1567 = vsel %vm538, %v1521, %v1523
      %v1568 = vsel %vm538, %v1525, %v1527
      %v1569 = vsel %vm538, %v1527, %v1529
      %v1570 = vsel %vm538, %v1531, %v1533
      %v1571 = vsel %vm538, %v1533, %v1535
      %vm1608 = vcmask 261120
      %v1610 = vsel %vm1608, %v1420, 0
      %v1613 = vsel %vm1608, %v1423, 0
      %1615 = vmatpush.bf16.msra.mxu0 %v1550
      %1616 = vmatpush.bf16.msra.mxu0 %v1548
      %1617 = vmatpush.bf16.msra.mxu0 %v1546
      %1618 = vmatpush.bf16.msra.mxu0 %v1544
      %1619 = vmatpush.bf16.msra.mxu0 %v1542
      %1620 = vmatpush.bf16.msra.mxu0 %v1540
      %1621 = vmatpush.bf16.msra.mxu0 %v1538
      %1622 = vmatpush.bf16.msra.mxu0 %v1536
      %1623 = vmatmul.bf16.gmra.mxu0 %v1418
      %v1624 = vpop.f32.mrf.mxu0
      %v1625 = vadd.f32 %v1381, %v1624
      %v1626 = vpop.f32.mrf.mxu0
      %v1627 = vadd.f32 %v1386, %v1626
      %1628 = vmatmul.bf16.gmra.mxu0 %v1421
      %v1629 = vpop.f32.mrf.mxu0
      %v1630 = vadd.f32 %v1391, %v1629
      %v1631 = vpop.f32.mrf.mxu0
      %v1632 = vadd.f32 %v1396, %v1631
      %1633 = vdwg.mxu0
      %1634 = vmatpush.bf16.msra.mxu0 %v1566
      %1635 = vmatpush.bf16.msra.mxu0 %v1564
      %1636 = vmatpush.bf16.msra.mxu0 %v1562
      %1637 = vmatpush.bf16.msra.mxu0 %v1560
      %1638 = vmatpush.bf16.msra.mxu0 %v1558
      %1639 = vmatpush.bf16.msra.mxu0 %v1556
      %1640 = vmatpush.bf16.msra.mxu0 %v1554
      %1641 = vmatpush.bf16.msra.mxu0 %v1552
      %1642 = vmatmul.bf16.gmra.mxu0 %v1419
      %v1643 = vpop.f32.mrf.mxu0
      %v1644 = vadd.f32 %v1625, %v1643
      %v1645 = vpop.f32.mrf.mxu0
      %v1646 = vadd.f32 %v1627, %v1645
      %1647 = vmatmul.bf16.gmra.mxu0 %v1422
      %v1648 = vpop.f32.mrf.mxu0
      %v1649 = vadd.f32 %v1630, %v1648
      %v1650 = vpop.f32.mrf.mxu0
      %v1651 = vadd.f32 %v1632, %v1650
      %1652 = vdwg.mxu0
      %1653 = vmatpush.bf16.msra.mxu0 0
      %1654 = vmatpush.bf16.msra.mxu0 0
      %1655 = vmatpush.bf16.msra.mxu0 0
      %1656 = vmatpush.bf16.msra.mxu0 0
      %1657 = vmatpush.bf16.msra.mxu0 0
      %1658 = vmatpush.bf16.msra.mxu0 0
      %1659 = vmatpush.bf16.msra.mxu0 %v1570
      %1660 = vmatpush.bf16.msra.mxu0 %v1568
      %1661 = vmatmul.bf16.gmra.mxu0 %v1610
      %v1662 = vpop.f32.mrf.mxu0
      %v1663 = vadd.f32 %v1644, %v1662
      %v1664 = vpop.f32.mrf.mxu0
      %v1665 = vadd.f32 %v1646, %v1664
      %1666 = vmatmul.bf16.gmra.mxu0 %v1613
      %v1667 = vpop.f32.mrf.mxu0
      %v1668 = vadd.f32 %v1649, %v1667
      %v1669 = vpop.f32.mrf.mxu0
      %v1670 = vadd.f32 %v1651, %v1669
      %1671 = vdwg.mxu0
      %1672 = vmatpush.bf16.msra.mxu0 %v1551
      %1673 = vmatpush.bf16.msra.mxu0 %v1549
      %1674 = vmatpush.bf16.msra.mxu0 %v1547
      %1675 = vmatpush.bf16.msra.mxu0 %v1545
      %1676 = vmatpush.bf16.msra.mxu0 %v1543
      %1677 = vmatpush.bf16.msra.mxu0 %v1541
      %1678 = vmatpush.bf16.msra.mxu0 %v1539
      %1679 = vmatpush.bf16.msra.mxu0 %v1537
      %1680 = vmatmul.bf16.gmra.mxu0 %v1418
      %v1681 = vpop.f32.mrf.mxu0
      %v1682 = vadd.f32 %v1381, %v1681
      %v1683 = vpop.f32.mrf.mxu0
      %v1684 = vadd.f32 %v1386, %v1683
      %1685 = vmatmul.bf16.gmra.mxu0 %v1421
      %v1686 = vpop.f32.mrf.mxu0
      %v1687 = vadd.f32 %v1391, %v1686
      %v1688 = vpop.f32.mrf.mxu0
      %v1689 = vadd.f32 %v1396, %v1688
      %1690 = vdwg.mxu0
      %1691 = vmatpush.bf16.msra.mxu0 %v1567
      %1692 = vmatpush.bf16.msra.mxu0 %v1565
      %1693 = vmatpush.bf16.msra.mxu0 %v1563
      %1694 = vmatpush.bf16.msra.mxu0 %v1561
      %1695 = vmatpush.bf16.msra.mxu0 %v1559
      %1696 = vmatpush.bf16.msra.mxu0 %v1557
      %1697 = vmatpush.bf16.msra.mxu0 %v1555
      %1698 = vmatpush.bf16.msra.mxu0 %v1553
      %1699 = vmatmul.bf16.gmra.mxu0 %v1419
      %v1700 = vpop.f32.mrf.mxu0
      %v1701 = vadd.f32 %v1682, %v1700
      %v1702 = vpop.f32.mrf.mxu0
      %v1703 = vadd.f32 %v1684, %v1702
      %1704 = vmatmul.bf16.gmra.mxu0 %v1422
      %v1705 = vpop.f32.mrf.mxu0
      %v1706 = vadd.f32 %v1687, %v1705
      %v1707 = vpop.f32.mrf.mxu0
      %v1708 = vadd.f32 %v1689, %v1707
      %1709 = vdwg.mxu0
      %1710 = vmatpush.bf16.msra.mxu0 0
      %1711 = vmatpush.bf16.msra.mxu0 0
      %1712 = vmatpush.bf16.msra.mxu0 0
      %1713 = vmatpush.bf16.msra.mxu0 0
      %1714 = vmatpush.bf16.msra.mxu0 0
      %1715 = vmatpush.bf16.msra.mxu0 0
      %1716 = vmatpush.bf16.msra.mxu0 %v1571
      %1717 = vmatpush.bf16.msra.mxu0 %v1569
      %1718 = vmatmul.bf16.gmra.mxu0 %v1610
      %v1719 = vpop.f32.mrf.mxu0
      %v1720 = vadd.f32 %v1701, %v1719
      %v1721 = vpop.f32.mrf.mxu0
      %v1722 = vadd.f32 %v1703, %v1721
      %1723 = vmatmul.bf16.gmra.mxu0 %v1613
      %v1724 = vpop.f32.mrf.mxu0
      %v1725 = vadd.f32 %v1706, %v1724
      %v1726 = vpop.f32.mrf.mxu0
      %v1727 = vadd.f32 %v1708, %v1726
      %1728 = vdwg.mxu0
      %v1729 = vmax.f32 %v1663, 0.0
      %v1730 = vmax.f32 %v1720, 0.0
      %v1731 = vmax.f32 %v1665, 0.0
      %v1732 = vmax.f32 %v1722, 0.0
      %v1733 = vmax.f32 %v1668, 0.0
      %v1734 = vmax.f32 %v1725, 0.0
      %v1735 = vmax.f32 %v1670, 0.0
      %v1736 = vmax.f32 %v1727, 0.0
      %v1737 = vpack.c.bf16 %v1730, %v1729
      %v1738 = vpack.c.bf16 %v1732, %v1731
      %v1739 = vpack.c.bf16 %v1734, %v1733
      %v1740 = vpack.c.bf16 %v1736, %v1735
      %1741 = vst [vmem:[#allocation3 + $0x4] sm:$0xff] %v1737
      %1742 = vst [vmem:[#allocation3 + $0x14] sm:$0xff] %v1738
      %1743 = vst [vmem:[#allocation3 + $0x24] sm:$0xff] %v1739
      %1744 = vst [vmem:[#allocation3 + $0x34] sm:$0xff] %v1740
      %v1745 = vld [vmem:[#allocation3] sm:$0xff]
      %v1746 = vld [vmem:[#allocation3 + $0x8] sm:$0xf]
      %v1747 = vld [vmem:[#allocation3 + $0x10] sm:$0xff]
      %v1748 = vld [vmem:[#allocation3 + $0x18] sm:$0xf]
      %v1749 = vld [vmem:[#allocation3 + $0x20] sm:$0xff]
      %v1750 = vld [vmem:[#allocation3 + $0x28] sm:$0xf]
      %v1751 = vld [vmem:[#allocation3 + $0x30] sm:$0xff]
      %v1752 = vld [vmem:[#allocation3 + $0x38] sm:$0xf]
      %v1753 = vsel %vm419, %v1745, 0
      %v1754 = vsel %vm426, %v1746, 0
      %v1755 = vsel %vm419, %v1747, 0
      %v1756 = vsel %vm426, %v1748, 0
      %v1757 = vsel %vm419, %v1749, 0
      %v1758 = vsel %vm426, %v1750, 0
      %v1759 = vsel %vm419, %v1751, 0
      %v1760 = vsel %vm426, %v1752, 0
      %v1761 = vsel %vm448, %v1745, 0
      %v1762 = vsel %vm455, %v1746, 0
      %v1763 = vsel %vm448, %v1747, 0
      %v1764 = vsel %vm455, %v1748, 0
      %v1765 = vsel %vm448, %v1749, 0
      %v1766 = vsel %vm455, %v1750, 0
      %v1767 = vsel %vm448, %v1751, 0
      %v1768 = vsel %vm455, %v1752, 0
      %v1769 = vsel %vm471, %v1745, 0
      %v1770 = vsel %vm478, %v1746, 0
      %v1771 = vsel %vm471, %v1747, 0
      %v1772 = vsel %vm478, %v1748, 0
      %v1773 = vsel %vm471, %v1749, 0
      %v1774 = vsel %vm478, %v1750, 0
      %v1775 = vsel %vm471, %v1751, 0
      %v1776 = vsel %vm478, %v1752, 0
      %v1777 = vld [vmem:[#allocation3 + $0x4] sm:$0xff]
      %v1778 = vld [vmem:[#allocation3 + $0x14] sm:$0xff]
      %v1779 = vld [vmem:[#allocation3 + $0x24] sm:$0xff]
      %v1780 = vld [vmem:[#allocation3 + $0x34] sm:$0xff]
      %v1781 = vld [vmem:[#allocation3 + $0x4] sm:$0xff]
      %v1782 = vld [vmem:[#allocation3 + $0xc] sm:$0xf]
      %v1783 = vld [vmem:[#allocation3 + $0x14] sm:$0xff]
      %v1784 = vld [vmem:[#allocation3 + $0x1c] sm:$0xf]
      %v1785 = vld [vmem:[#allocation3 + $0x24] sm:$0xff]
      %v1786 = vld [vmem:[#allocation3 + $0x2c] sm:$0xf]
      %v1787 = vld [vmem:[#allocation3 + $0x34] sm:$0xff]
      %v1788 = vld [vmem:[#allocation3 + $0x3c] sm:$0xf]
      %v1789 = vsel %vm500, %v1781, 0
      %v1790 = vsel %vm507, %v1782, 0
      %v1791 = vsel %vm500, %v1783, 0
      %v1792 = vsel %vm507, %v1784, 0
      %v1793 = vsel %vm500, %v1785, 0
      %v1794 = vsel %vm507, %v1786, 0
      %v1795 = vsel %vm500, %v1787, 0
      %v1796 = vsel %vm507, %v1788, 0
      %v1797 = vsel %vm523, %v1781, 0
      %v1798 = vsel %vm530, %v1782, 0
      %v1799 = vsel %vm523, %v1783, 0
      %v1800 = vsel %vm530, %v1784, 0
      %v1801 = vsel %vm523, %v1785, 0
      %v1802 = vsel %vm530, %v1786, 0
      %v1803 = vsel %vm523, %v1787, 0
      %v1804 = vsel %vm530, %v1788, 0
      %v1805 = vsel %vm546, %v1781, 0
      %v1806 = vsel %vm553, %v1782, 0
      %v1807 = vsel %vm546, %v1783, 0
      %v1808 = vsel %vm553, %v1784, 0
      %v1809 = vsel %vm546, %v1785, 0
      %v1810 = vsel %vm553, %v1786, 0
      %v1811 = vsel %vm546, %v1787, 0
      %v1812 = vsel %vm553, %v1788, 0
      %v1821 = vunpack.c.l.b16 %v1753
      %v1822 = vunpack.c.h.b16 %v1753
      %v1823 = vunpack.c.l.b16 %v1754
      %v1824 = vunpack.c.l.b16 %v1755
      %v1825 = vunpack.c.h.b16 %v1755
      %v1826 = vunpack.c.l.b16 %v1756
      %v1827 = vunpack.c.l.b16 %v1757
      %v1828 = vunpack.c.h.b16 %v1757
      %v1829 = vunpack.c.l.b16 %v1758
      %v1830 = vunpack.c.l.b16 %v1759
      %v1831 = vunpack.c.h.b16 %v1759
      %v1832 = vunpack.c.l.b16 %v1760
      %v1833 = vpack.c.b16 %v1824, %v1821
      %v1834 = vpack.c.b16 %v1825, %v1822
      %v1835 = vpack.c.b16 %v1826, %v1823
      %v1836 = vpack.c.b16 %v1830, %v1827
      %v1837 = vpack.c.b16 %v1831, %v1828
      %v1838 = vpack.c.b16 %v1832, %v1829
      %v1847 = vunpack.c.l.b16 %v1745
      %v1848 = vunpack.c.h.b16 %v1745
      %v1849 = vunpack.c.l.b16 %v1746
      %v1850 = vunpack.c.l.b16 %v1747
      %v1851 = vunpack.c.h.b16 %v1747
      %v1852 = vunpack.c.l.b16 %v1748
      %v1853 = vunpack.c.l.b16 %v1749
      %v1854 = vunpack.c.h.b16 %v1749
      %v1855 = vunpack.c.l.b16 %v1750
      %v1856 = vunpack.c.l.b16 %v1751
      %v1857 = vunpack.c.h.b16 %v1751
      %v1858 = vunpack.c.l.b16 %v1752
      %v1859 = vpack.c.b16 %v1850, %v1847
      %v1860 = vpack.c.b16 %v1851, %v1848
      %v1861 = vpack.c.b16 %v1852, %v1849
      %v1862 = vpack.c.b16 %v1856, %v1853
      %v1863 = vpack.c.b16 %v1857, %v1854
      %v1864 = vpack.c.b16 %v1858, %v1855
      %1865 = vrot.lane.b32.xlu0 %v1859, 127
      %v1866 = vpop.permute.xlu0 %1865
      %1867 = vrot.lane.b32.xlu0 %v1860, 127
      %v1868 = vpop.permute.xlu0 %1867
      %1869 = vrot.lane.b32.xlu0 %v1861, 127
      %v1870 = vpop.permute.xlu0 %1869
      %1871 = vrot.lane.b32.xlu0 %v1862, 127
      %v1872 = vpop.permute.xlu0 %1871
      %1873 = vrot.lane.b32.xlu0 %v1863, 127
      %v1874 = vpop.permute.xlu0 %1873
      %1875 = vrot.lane.b32.xlu0 %v1864, 127
      %v1876 = vpop.permute.xlu0 %1875
      %v1877 = vsel %vm463, %v1866, %v1868
      %v1878 = vsel %vm463, %v1868, %v1870
      %v1879 = vsel %vm463, %v1872, %v1874
      %v1880 = vsel %vm463, %v1874, %v1876
      %v1889 = vunpack.c.l.b16 %v1761
      %v1890 = vunpack.c.h.b16 %v1761
      %v1891 = vunpack.c.l.b16 %v1762
      %v1892 = vunpack.c.l.b16 %v1763
      %v1893 = vunpack.c.h.b16 %v1763
      %v1894 = vunpack.c.l.b16 %v1764
      %v1895 = vunpack.c.l.b16 %v1765
      %v1896 = vunpack.c.h.b16 %v1765
      %v1897 = vunpack.c.l.b16 %v1766
      %v1898 = vunpack.c.l.b16 %v1767
      %v1899 = vunpack.c.h.b16 %v1767
      %v1900 = vunpack.c.l.b16 %v1768
      %v1901 = vpack.c.b16 %v1892, %v1889
      %v1902 = vpack.c.b16 %v1893, %v1890
      %v1903 = vpack.c.b16 %v1894, %v1891
      %v1904 = vpack.c.b16 %v1898, %v1895
      %v1905 = vpack.c.b16 %v1899, %v1896
      %v1906 = vpack.c.b16 %v1900, %v1897
      %1907 = vrot.lane.b32.xlu0 %v1901, 126
      %v1908 = vpop.permute.xlu0 %1907
      %1909 = vrot.lane.b32.xlu0 %v1902, 126
      %v1910 = vpop.permute.xlu0 %1909
      %1911 = vrot.lane.b32.xlu0 %v1903, 126
      %v1912 = vpop.permute.xlu0 %1911
      %1913 = vrot.lane.b32.xlu0 %v1904, 126
      %v1914 = vpop.permute.xlu0 %1913
      %1915 = vrot.lane.b32.xlu0 %v1905, 126
      %v1916 = vpop.permute.xlu0 %1915
      %1917 = vrot.lane.b32.xlu0 %v1906, 126
      %v1918 = vpop.permute.xlu0 %1917
      %v1919 = vsel %vm611, %v1908, %v1910
      %v1920 = vsel %vm611, %v1910, %v1912
      %v1921 = vsel %vm611, %v1914, %v1916
      %v1922 = vsel %vm611, %v1916, %v1918
      %v1931 = vunpack.c.l.b16 %v1769
      %v1932 = vunpack.c.h.b16 %v1769
      %v1933 = vunpack.c.l.b16 %v1770
      %v1934 = vunpack.c.l.b16 %v1771
      %v1935 = vunpack.c.h.b16 %v1771
      %v1936 = vunpack.c.l.b16 %v1772
      %v1937 = vunpack.c.l.b16 %v1773
      %v1938 = vunpack.c.h.b16 %v1773
      %v1939 = vunpack.c.l.b16 %v1774
      %v1940 = vunpack.c.l.b16 %v1775
      %v1941 = vunpack.c.h.b16 %v1775
      %v1942 = vunpack.c.l.b16 %v1776
      %v1943 = vpack.c.b16 %v1934, %v1931
      %v1944 = vpack.c.b16 %v1935, %v1932
      %v1945 = vpack.c.b16 %v1936, %v1933
      %v1946 = vpack.c.b16 %v1940, %v1937
      %v1947 = vpack.c.b16 %v1941, %v1938
      %v1948 = vpack.c.b16 %v1942, %v1939
      %1949 = vrot.lane.b32.xlu0 %v1943, 112
      %v1950 = vpop.permute.xlu0 %1949
      %1951 = vrot.lane.b32.xlu0 %v1944, 112
      %v1952 = vpop.permute.xlu0 %1951
      %1953 = vrot.lane.b32.xlu0 %v1945, 112
      %v1954 = vpop.permute.xlu0 %1953
      %1955 = vrot.lane.b32.xlu0 %v1946, 112
      %v1956 = vpop.permute.xlu0 %1955
      %1957 = vrot.lane.b32.xlu0 %v1947, 112
      %v1958 = vpop.permute.xlu0 %1957
      %1959 = vrot.lane.b32.xlu0 %v1948, 112
      %v1960 = vpop.permute.xlu0 %1959
      %v1961 = vsel %vm633, %v1950, %v1952
      %v1962 = vsel %vm633, %v1952, %v1954
      %v1963 = vsel %vm633, %v1956, %v1958
      %v1964 = vsel %vm633, %v1958, %v1960
      %v1969 = vunpack.c.l.b16 %v1777
      %v1970 = vunpack.c.h.b16 %v1777
      %v1971 = vunpack.c.l.b16 %v1778
      %v1972 = vunpack.c.h.b16 %v1778
      %v1973 = vunpack.c.l.b16 %v1779
      %v1974 = vunpack.c.h.b16 %v1779
      %v1975 = vunpack.c.l.b16 %v1780
      %v1976 = vunpack.c.h.b16 %v1780
      %v1977 = vpack.c.b16 %v1971, %v1969
      %v1978 = vpack.c.b16 %v1972, %v1970
      %v1979 = vpack.c.b16 %v1975, %v1973
      %v1980 = vpack.c.b16 %v1976, %v1974
      %1981 = vrot.lane.b32.xlu0 %v1977, 111
      %v1982 = vpop.permute.xlu0 %1981
      %1983 = vrot.lane.b32.xlu0 %v1978, 111
      %v1984 = vpop.permute.xlu0 %1983
      %1985 = vrot.lane.b32.xlu0 %v1979, 111
      %v1986 = vpop.permute.xlu0 %1985
      %1987 = vrot.lane.b32.xlu0 %v1980, 111
      %v1988 = vpop.permute.xlu0 %1987
      %v1989 = vsel %vm411, %v1982, %v1984
      %v1990 = vsel %vm411, %v1986, %v1988
      %v1999 = vunpack.c.l.b16 %v1789
      %v2000 = vunpack.c.h.b16 %v1789
      %v2001 = vunpack.c.l.b16 %v1790
      %v2002 = vunpack.c.l.b16 %v1791
      %v2003 = vunpack.c.h.b16 %v1791
      %v2004 = vunpack.c.l.b16 %v1792
      %v2005 = vunpack.c.l.b16 %v1793
      %v2006 = vunpack.c.h.b16 %v1793
      %v2007 = vunpack.c.l.b16 %v1794
      %v2008 = vunpack.c.l.b16 %v1795
      %v2009 = vunpack.c.h.b16 %v1795
      %v2010 = vunpack.c.l.b16 %v1796
      %v2011 = vpack.c.b16 %v2002, %v1999
      %v2012 = vpack.c.b16 %v2003, %v2000
      %v2013 = vpack.c.b16 %v2004, %v2001
      %v2014 = vpack.c.b16 %v2008, %v2005
      %v2015 = vpack.c.b16 %v2009, %v2006
      %v2016 = vpack.c.b16 %v2010, %v2007
      %2017 = vrot.lane.b32.xlu0 %v2011, 110
      %v2018 = vpop.permute.xlu0 %2017
      %2019 = vrot.lane.b32.xlu0 %v2012, 110
      %v2020 = vpop.permute.xlu0 %2019
      %2021 = vrot.lane.b32.xlu0 %v2013, 110
      %v2022 = vpop.permute.xlu0 %2021
      %2023 = vrot.lane.b32.xlu0 %v2014, 110
      %v2024 = vpop.permute.xlu0 %2023
      %2025 = vrot.lane.b32.xlu0 %v2015, 110
      %v2026 = vpop.permute.xlu0 %2025
      %2027 = vrot.lane.b32.xlu0 %v2016, 110
      %v2028 = vpop.permute.xlu0 %2027
      %v2029 = vsel %vm668, %v2018, %v2020
      %v2030 = vsel %vm668, %v2020, %v2022
      %v2031 = vsel %vm668, %v2024, %v2026
      %v2032 = vsel %vm668, %v2026, %v2028
      %v2041 = vunpack.c.l.b16 %v1797
      %v2042 = vunpack.c.h.b16 %v1797
      %v2043 = vunpack.c.l.b16 %v1798
      %v2044 = vunpack.c.l.b16 %v1799
      %v2045 = vunpack.c.h.b16 %v1799
      %v2046 = vunpack.c.l.b16 %v1800
      %v2047 = vunpack.c.l.b16 %v1801
      %v2048 = vunpack.c.h.b16 %v1801
      %v2049 = vunpack.c.l.b16 %v1802
      %v2050 = vunpack.c.l.b16 %v1803
      %v2051 = vunpack.c.h.b16 %v1803
      %v2052 = vunpack.c.l.b16 %v1804
      %v2053 = vpack.c.b16 %v2044, %v2041
      %v2054 = vpack.c.b16 %v2045, %v2042
      %v2055 = vpack.c.b16 %v2046, %v2043
      %v2056 = vpack.c.b16 %v2050, %v2047
      %v2057 = vpack.c.b16 %v2051, %v2048
      %v2058 = vpack.c.b16 %v2052, %v2049
      %2059 = vrot.lane.b32.xlu0 %v2053, 96
      %v2060 = vpop.permute.xlu0 %2059
      %2061 = vrot.lane.b32.xlu0 %v2054, 96
      %v2062 = vpop.permute.xlu0 %2061
      %2063 = vrot.lane.b32.xlu0 %v2055, 96
      %v2064 = vpop.permute.xlu0 %2063
      %2065 = vrot.lane.b32.xlu0 %v2056, 96
      %v2066 = vpop.permute.xlu0 %2065
      %2067 = vrot.lane.b32.xlu0 %v2057, 96
      %v2068 = vpop.permute.xlu0 %2067
      %2069 = vrot.lane.b32.xlu0 %v2058, 96
      %v2070 = vpop.permute.xlu0 %2069
      %v2071 = vsel %vm690, %v2060, %v2062
      %v2072 = vsel %vm690, %v2062, %v2064
      %v2073 = vsel %vm690, %v2066, %v2068
      %v2074 = vsel %vm690, %v2068, %v2070
      %v2083 = vunpack.c.l.b16 %v1781
      %v2084 = vunpack.c.h.b16 %v1781
      %v2085 = vunpack.c.l.b16 %v1782
      %v2086 = vunpack.c.l.b16 %v1783
      %v2087 = vunpack.c.h.b16 %v1783
      %v2088 = vunpack.c.l.b16 %v1784
      %v2089 = vunpack.c.l.b16 %v1785
      %v2090 = vunpack.c.h.b16 %v1785
      %v2091 = vunpack.c.l.b16 %v1786
      %v2092 = vunpack.c.l.b16 %v1787
      %v2093 = vunpack.c.h.b16 %v1787
      %v2094 = vunpack.c.l.b16 %v1788
      %v2095 = vpack.c.b16 %v2086, %v2083
      %v2096 = vpack.c.b16 %v2087, %v2084
      %v2097 = vpack.c.b16 %v2088, %v2085
      %v2098 = vpack.c.b16 %v2092, %v2089
      %v2099 = vpack.c.b16 %v2093, %v2090
      %v2100 = vpack.c.b16 %v2094, %v2091
      %2101 = vrot.lane.b32.xlu0 %v2095, 95
      %v2102 = vpop.permute.xlu0 %2101
      %2103 = vrot.lane.b32.xlu0 %v2096, 95
      %v2104 = vpop.permute.xlu0 %2103
      %2105 = vrot.lane.b32.xlu0 %v2097, 95
      %v2106 = vpop.permute.xlu0 %2105
      %2107 = vrot.lane.b32.xlu0 %v2098, 95
      %v2108 = vpop.permute.xlu0 %2107
      %2109 = vrot.lane.b32.xlu0 %v2099, 95
      %v2110 = vpop.permute.xlu0 %2109
      %2111 = vrot.lane.b32.xlu0 %v2100, 95
      %v2112 = vpop.permute.xlu0 %2111
      %v2113 = vsel %vm712, %v2102, %v2104
      %v2114 = vsel %vm712, %v2104, %v2106
      %v2115 = vsel %vm712, %v2108, %v2110
      %v2116 = vsel %vm712, %v2110, %v2112
      %v2125 = vunpack.c.l.b16 %v1805
      %v2126 = vunpack.c.h.b16 %v1805
      %v2127 = vunpack.c.l.b16 %v1806
      %v2128 = vunpack.c.l.b16 %v1807
      %v2129 = vunpack.c.h.b16 %v1807
      %v2130 = vunpack.c.l.b16 %v1808
      %v2131 = vunpack.c.l.b16 %v1809
      %v2132 = vunpack.c.h.b16 %v1809
      %v2133 = vunpack.c.l.b16 %v1810
      %v2134 = vunpack.c.l.b16 %v1811
      %v2135 = vunpack.c.h.b16 %v1811
      %v2136 = vunpack.c.l.b16 %v1812
      %v2137 = vpack.c.b16 %v2128, %v2125
      %v2138 = vpack.c.b16 %v2129, %v2126
      %v2139 = vpack.c.b16 %v2130, %v2127
      %v2140 = vpack.c.b16 %v2134, %v2131
      %v2141 = vpack.c.b16 %v2135, %v2132
      %v2142 = vpack.c.b16 %v2136, %v2133
      %2143 = vrot.lane.b32.xlu0 %v2137, 94
      %v2144 = vpop.permute.xlu0 %2143
      %2145 = vrot.lane.b32.xlu0 %v2138, 94
      %v2146 = vpop.permute.xlu0 %2145
      %2147 = vrot.lane.b32.xlu0 %v2139, 94
      %v2148 = vpop.permute.xlu0 %2147
      %2149 = vrot.lane.b32.xlu0 %v2140, 94
      %v2150 = vpop.permute.xlu0 %2149
      %2151 = vrot.lane.b32.xlu0 %v2141, 94
      %v2152 = vpop.permute.xlu0 %2151
      %2153 = vrot.lane.b32.xlu0 %v2142, 94
      %v2154 = vpop.permute.xlu0 %2153
      %v2155 = vsel %vm734, %v2144, %v2146
      %v2156 = vsel %vm734, %v2146, %v2148
      %v2157 = vsel %vm734, %v2150, %v2152
      %v2158 = vsel %vm734, %v2152, %v2154
      %2160 = vset.pattern.permute.xlu0 0
      %2161 = vperm.xlu0 %2160, %v366
      %v2162 = vpop.permute.xlu0 %2161
      %2165 = vst [vmem:[#allocation1] ss:$4 sm:$0xff] %v365
      %v2166 = vld.sshfl [vmem:[#allocation1] sm:$0xff pattern:$0x73625140]
      %v2167 = vld.sshfl [vmem:[#allocation1 + $0x8] sm:$0xff pattern:$0x73625140]
      %v2168 = vld.sshfl [vmem:[#allocation1 + $0x10] sm:$0xff pattern:$0x73625140]
      %2171 = vrot.lane.b32.xlu0 %v1833, 17
      %v2172 = vpop.permute.xlu0 %2171
      %2173 = vrot.lane.b32.xlu0 %v1834, 17
      %v2174 = vpop.permute.xlu0 %2173
      %2175 = vrot.lane.b32.xlu0 %v1835, 17
      %v2176 = vpop.permute.xlu0 %2175
      %2177 = vrot.lane.b32.xlu0 %v1836, 17
      %v2178 = vpop.permute.xlu0 %2177
      %2179 = vrot.lane.b32.xlu0 %v1837, 17
      %v2180 = vpop.permute.xlu0 %2179
      %2181 = vrot.lane.b32.xlu0 %v1838, 17
      %v2182 = vpop.permute.xlu0 %2181
      %2183 = vrot.lane.b32.xlu0 %v1877, 17
      %v2184 = vpop.permute.xlu0 %2183
      %2185 = vrot.lane.b32.xlu0 %v1878, 17
      %v2186 = vpop.permute.xlu0 %2185
      %2187 = vrot.lane.b32.xlu0 %v1870, 17
      %v2188 = vpop.permute.xlu0 %2187
      %2189 = vrot.lane.b32.xlu0 %v1879, 17
      %v2190 = vpop.permute.xlu0 %2189
      %2191 = vrot.lane.b32.xlu0 %v1880, 17
      %v2192 = vpop.permute.xlu0 %2191
      %2193 = vrot.lane.b32.xlu0 %v1876, 17
      %v2194 = vpop.permute.xlu0 %2193
      %2195 = vrot.lane.b32.xlu0 %v1919, 17
      %v2196 = vpop.permute.xlu0 %2195
      %2197 = vrot.lane.b32.xlu0 %v1920, 17
      %v2198 = vpop.permute.xlu0 %2197
      %2199 = vrot.lane.b32.xlu0 %v1912, 17
      %v2200 = vpop.permute.xlu0 %2199
      %2201 = vrot.lane.b32.xlu0 %v1921, 17
      %v2202 = vpop.permute.xlu0 %2201
      %2203 = vrot.lane.b32.xlu0 %v1922, 17
      %v2204 = vpop.permute.xlu0 %2203
      %2205 = vrot.lane.b32.xlu0 %v1918, 17
      %v2206 = vpop.permute.xlu0 %2205
      %2207 = vrot.lane.b32.xlu0 %v1961, 17
      %v2208 = vpop.permute.xlu0 %2207
      %2209 = vrot.lane.b32.xlu0 %v1962, 17
      %v2210 = vpop.permute.xlu0 %2209
      %2211 = vrot.lane.b32.xlu0 %v1954, 17
      %v2212 = vpop.permute.xlu0 %2211
      %2213 = vrot.lane.b32.xlu0 %v1963, 17
      %v2214 = vpop.permute.xlu0 %2213
      %2215 = vrot.lane.b32.xlu0 %v1964, 17
      %v2216 = vpop.permute.xlu0 %2215
      %2217 = vrot.lane.b32.xlu0 %v1960, 17
      %v2218 = vpop.permute.xlu0 %2217
      %2219 = vrot.lane.b32.xlu0 %v1982, 17
      %v2220 = vpop.permute.xlu0 %2219
      %2221 = vrot.lane.b32.xlu0 %v1989, 17
      %v2222 = vpop.permute.xlu0 %2221
      %2223 = vrot.lane.b32.xlu0 %v1984, 17
      %v2224 = vpop.permute.xlu0 %2223
      %2225 = vrot.lane.b32.xlu0 %v1986, 17
      %v2226 = vpop.permute.xlu0 %2225
      %2227 = vrot.lane.b32.xlu0 %v1990, 17
      %v2228 = vpop.permute.xlu0 %2227
      %2229 = vrot.lane.b32.xlu0 %v1988, 17
      %v2230 = vpop.permute.xlu0 %2229
      %2231 = vrot.lane.b32.xlu0 %v2018, 17
      %v2232 = vpop.permute.xlu0 %2231
      %2233 = vrot.lane.b32.xlu0 %v2029, 17
      %v2234 = vpop.permute.xlu0 %2233
      %2235 = vrot.lane.b32.xlu0 %v2030, 17
      %v2236 = vpop.permute.xlu0 %2235
      %2237 = vrot.lane.b32.xlu0 %v2024, 17
      %v2238 = vpop.permute.xlu0 %2237
      %2239 = vrot.lane.b32.xlu0 %v2031, 17
      %v2240 = vpop.permute.xlu0 %2239
      %2241 = vrot.lane.b32.xlu0 %v2032, 17
      %v2242 = vpop.permute.xlu0 %2241
      %2243 = vrot.lane.b32.xlu0 %v2060, 17
      %v2244 = vpop.permute.xlu0 %2243
      %2245 = vrot.lane.b32.xlu0 %v2071, 17
      %v2246 = vpop.permute.xlu0 %2245
      %2247 = vrot.lane.b32.xlu0 %v2072, 17
      %v2248 = vpop.permute.xlu0 %2247
      %2249 = vrot.lane.b32.xlu0 %v2066, 17
      %v2250 = vpop.permute.xlu0 %2249
      %2251 = vrot.lane.b32.xlu0 %v2073, 17
      %v2252 = vpop.permute.xlu0 %2251
      %2253 = vrot.lane.b32.xlu0 %v2074, 17
      %v2254 = vpop.permute.xlu0 %2253
      %2255 = vrot.lane.b32.xlu0 %v2102, 17
      %v2256 = vpop.permute.xlu0 %2255
      %2257 = vrot.lane.b32.xlu0 %v2113, 17
      %v2258 = vpop.permute.xlu0 %2257
      %2259 = vrot.lane.b32.xlu0 %v2114, 17
      %v2260 = vpop.permute.xlu0 %2259
      %2261 = vrot.lane.b32.xlu0 %v2108, 17
      %v2262 = vpop.permute.xlu0 %2261
      %2263 = vrot.lane.b32.xlu0 %v2115, 17
      %v2264 = vpop.permute.xlu0 %2263
      %2265 = vrot.lane.b32.xlu0 %v2116, 17
      %v2266 = vpop.permute.xlu0 %2265
      %2267 = vrot.lane.b32.xlu0 %v2144, 17
      %v2268 = vpop.permute.xlu0 %2267
      %2269 = vrot.lane.b32.xlu0 %v2155, 17
      %v2270 = vpop.permute.xlu0 %2269
      %2271 = vrot.lane.b32.xlu0 %v2156, 17
      %v2272 = vpop.permute.xlu0 %2271
      %2273 = vrot.lane.b32.xlu0 %v2150, 17
      %v2274 = vpop.permute.xlu0 %2273
      %2275 = vrot.lane.b32.xlu0 %v2157, 17
      %v2276 = vpop.permute.xlu0 %2275
      %2277 = vrot.lane.b32.xlu0 %v2158, 17
      %v2278 = vpop.permute.xlu0 %2277
      %v2279 = vsel %vm538, %v2172, %v2174
      %v2280 = vsel %vm538, %v2174, %v2176
      %v2281 = vsel %vm538, %v2178, %v2180
      %v2282 = vsel %vm538, %v2180, %v2182
      %v2283 = vsel %vm538, %v2184, %v2186
      %v2284 = vsel %vm538, %v2186, %v2188
      %v2285 = vsel %vm538, %v2190, %v2192
      %v2286 = vsel %vm538, %v2192, %v2194
      %v2287 = vsel %vm538, %v2196, %v2198
      %v2288 = vsel %vm538, %v2198, %v2200
      %v2289 = vsel %vm538, %v2202, %v2204
      %v2290 = vsel %vm538, %v2204, %v2206
      %v2291 = vsel %vm538, %v2208, %v2210
      %v2292 = vsel %vm538, %v2210, %v2212
      %v2293 = vsel %vm538, %v2214, %v2216
      %v2294 = vsel %vm538, %v2216, %v2218
      %v2295 = vsel %vm538, %v2220, %v2222
      %v2296 = vsel %vm538, %v2222, %v2224
      %v2297 = vsel %vm538, %v2226, %v2228
      %v2298 = vsel %vm538, %v2228, %v2230
      %v2299 = vsel %vm538, %v2232, %v2234
      %v2300 = vsel %vm538, %v2234, %v2236
      %v2301 = vsel %vm538, %v2238, %v2240
      %v2302 = vsel %vm538, %v2240, %v2242
      %v2303 = vsel %vm538, %v2244, %v2246
      %v2304 = vsel %vm538, %v2246, %v2248
      %v2305 = vsel %vm538, %v2250, %v2252
      %v2306 = vsel %vm538, %v2252, %v2254
      %v2307 = vsel %vm538, %v2256, %v2258
      %v2308 = vsel %vm538, %v2258, %v2260
      %v2309 = vsel %vm538, %v2262, %v2264
      %v2310 = vsel %vm538, %v2264, %v2266
      %v2311 = vsel %vm538, %v2268, %v2270
      %v2312 = vsel %vm538, %v2270, %v2272
      %v2313 = vsel %vm538, %v2274, %v2276
      %v2314 = vsel %vm538, %v2276, %v2278
      %v2351 = vsel %vm1608, %v2168, 0
      %2353 = vmatpush.bf16.msra.mxu0 %v2293
      %2354 = vmatpush.bf16.msra.mxu0 %v2291
      %2355 = vmatpush.bf16.msra.mxu0 %v2289
      %2356 = vmatpush.bf16.msra.mxu0 %v2287
      %2357 = vmatpush.bf16.msra.mxu0 %v2285
      %2358 = vmatpush.bf16.msra.mxu0 %v2283
      %2359 = vmatpush.bf16.msra.mxu0 %v2281
      %2360 = vmatpush.bf16.msra.mxu0 %v2279
      %2361 = vmatmul.bf16.gmra.mxu0 %v2166
      %v2362 = vpop.f32.mrf.mxu0
      %v2363 = vadd.f32 %v2162, %v2362
      %v2364 = vpop.f32.mrf.mxu0
      %2365 = vdwg.mxu0
      %2366 = vmatpush.bf16.msra.mxu0 %v2309
      %2367 = vmatpush.bf16.msra.mxu0 %v2307
      %2368 = vmatpush.bf16.msra.mxu0 %v2305
      %2369 = vmatpush.bf16.msra.mxu0 %v2303
      %2370 = vmatpush.bf16.msra.mxu0 %v2301
      %2371 = vmatpush.bf16.msra.mxu0 %v2299
      %2372 = vmatpush.bf16.msra.mxu0 %v2297
      %2373 = vmatpush.bf16.msra.mxu0 %v2295
      %2374 = vmatmul.bf16.gmra.mxu0 %v2167
      %v2375 = vpop.f32.mrf.mxu0
      %v2376 = vadd.f32 %v2363, %v2375
      %v2377 = vpop.f32.mrf.mxu0
      %2378 = vdwg.mxu0
      %2379 = vmatpush.bf16.msra.mxu0 0
      %2380 = vmatpush.bf16.msra.mxu0 0
      %2381 = vmatpush.bf16.msra.mxu0 0
      %2382 = vmatpush.bf16.msra.mxu0 0
      %2383 = vmatpush.bf16.msra.mxu0 0
      %2384 = vmatpush.bf16.msra.mxu0 0
      %2385 = vmatpush.bf16.msra.mxu0 %v2313
      %2386 = vmatpush.bf16.msra.mxu0 %v2311
      %2387 = vmatmul.bf16.gmra.mxu0 %v2351
      %v2388 = vpop.f32.mrf.mxu0
      %v2389 = vadd.f32 %v2376, %v2388
      %v2390 = vpop.f32.mrf.mxu0
      %2391 = vdwg.mxu0
      %2392 = vmatpush.bf16.msra.mxu0 %v2294
      %2393 = vmatpush.bf16.msra.mxu0 %v2292
      %2394 = vmatpush.bf16.msra.mxu0 %v2290
      %2395 = vmatpush.bf16.msra.mxu0 %v2288
      %2396 = vmatpush.bf16.msra.mxu0 %v2286
      %2397 = vmatpush.bf16.msra.mxu0 %v2284
      %2398 = vmatpush.bf16.msra.mxu0 %v2282
      %2399 = vmatpush.bf16.msra.mxu0 %v2280
      %2400 = vmatmul.bf16.gmra.mxu0 %v2166
      %v2401 = vpop.f32.mrf.mxu0
      %v2402 = vadd.f32 %v2162, %v2401
      %v2403 = vpop.f32.mrf.mxu0
      %2404 = vdwg.mxu0
      %2405 = vmatpush.bf16.msra.mxu0 %v2310
      %2406 = vmatpush.bf16.msra.mxu0 %v2308
      %2407 = vmatpush.bf16.msra.mxu0 %v2306
      %2408 = vmatpush.bf16.msra.mxu0 %v2304
      %2409 = vmatpush.bf16.msra.mxu0 %v2302
      %2410 = vmatpush.bf16.msra.mxu0 %v2300
      %2411 = vmatpush.bf16.msra.mxu0 %v2298
      %2412 = vmatpush.bf16.msra.mxu0 %v2296
      %2413 = vmatmul.bf16.gmra.mxu0 %v2167
      %v2414 = vpop.f32.mrf.mxu0
      %v2415 = vadd.f32 %v2402, %v2414
      %v2416 = vpop.f32.mrf.mxu0
      %2417 = vdwg.mxu0
      %2418 = vmatpush.bf16.msra.mxu0 0
      %2419 = vmatpush.bf16.msra.mxu0 0
      %2420 = vmatpush.bf16.msra.mxu0 0
      %2421 = vmatpush.bf16.msra.mxu0 0
      %2422 = vmatpush.bf16.msra.mxu0 0
      %2423 = vmatpush.bf16.msra.mxu0 0
      %2424 = vmatpush.bf16.msra.mxu0 %v2314
      %2425 = vmatpush.bf16.msra.mxu0 %v2312
      %2426 = vmatmul.bf16.gmra.mxu0 %v2351
      %v2427 = vpop.f32.mrf.mxu0
      %v2428 = vadd.f32 %v2415, %v2427
      %v2429 = vpop.f32.mrf.mxu0
      %2430 = vdwg.mxu0
      %v2431 = vtanh.pop %v2389
      %v2432 = vtanh.pop %v2428
      %v2433 = vld [vmem:[%s320] sm:$0x77]
      %s2434 = scalar_lea.vmem %s320, 3
      %v2435 = vld [vmem:[%s2434] ss:$4 sm:$0x3]
      %2436 = vst [vmem:[%s325] sm:$0x7] %v2431
      %2437 = vst [vmem:[%s325 + $0x8] sm:$0x7] %v2432
      %v2439 = vperm.slane %v2435, 0
      %v2440 = vperm.slane %v2435, 1
      %v2443 = vmul.f32 %v2431, %v2439
      %v2444 = vmul.f32 %v2432, %v2440
      %v2445 = vsub.f32 1.0, %v2435
      %v2447 = vperm.slane %v2445, 0
      %v2448 = vperm.slane %v2445, 1
      %v2449 = vrot.slane %v2448, 4
      %vm2450 = vcmask 1043456
      %v2451 = vsel %vm2450, %v2447, %v2449
      %v2453 = vmul.f32 %v2433, %v2451
      %2455 = vst [vmem:[#allocation1] ss:$2 sm:$0xff] %v2453
      %v2456 = vld.sshfl [vmem:[#allocation1] sm:$0xff pattern:$0x75316420]
      %v2457 = vld.sshfl [vmem:[#allocation1 + $0x8] sm:$0xff pattern:$0x75316420]
      %v2460 = vadd.f32 %v2443, %v2456
      %v2461 = vadd.f32 %v2444, %v2457
      %v2464 = vrot.slane %v2460, 5
      %v2465 = vrot.slane %v2461, 5
      %2468 = vst [vmem:[%s325] sm:$0x38] %v2464
      %2469 = vst [vmem:[%s325 + $0x8] sm:$0x38] %v2465
      %p2470 = scmp.lt.s32.totalorder %s19, 1
      %s2471 = scalar_select %p2470, %s19, 1
      %s2472 = smul.addr %s2471, 2
      %s2473 = smul.addr %s2472, 8
      %s2474 = scalar_lea.vmem %s8, %s2473
      // Predicated region
      $region53: #{generator_forward.1} parent=51 // pred_check
        %p2475 = pneg %p215
      $region54: #{generator_forward.1} parent=51 // pred_check_branch
        %2477 = sbr.rel (%p2475) target = $region56
      $region55: #{generator_forward.1} parent=51 // pred_region
        _
      $region56: #{generator_forward.1} parent=51 // pred_fallthru
        _
    $region52: #{generator_forward.1} parent=5 // pred_fallthru
      _
    %p2478 = scmp.le.s32.totalorder 2, %s14
    // Predicated region
    $region57: #{generator_forward.1} parent=5 // pred_check
      %p2479 = pneg %p2478
    $region58: #{generator_forward.1} parent=5 // pred_check_branch
      %2481 = sbr.rel (%p2479) target = $region60
    $region59: #{generator_forward.1} parent=5 // pred_region
      %s2482 = ssub.s32 %s14, 2
      // Predicated region
      $region61: #{generator_forward.1} parent=59 // pred_check
        %p2483 = pneg %p221
      $region62: #{generator_forward.1} parent=59 // pred_check_branch
        %2485 = sbr.rel (%p2483) target = $region64
      $region63: #{generator_forward.1} parent=59 // pred_region
        %p2486 = scmp.lt.s32.totalorder %s20, 1
        %s2487 = scalar_select %p2486, %s20, 1
        %s2488 = smul.addr %s2487, 2
        %s2489 = smul.addr %s2488, 8
        %s2490 = scalar_lea.vmem %s8, %s2489
      $region64: #{generator_forward.1} parent=59 // pred_fallthru
        _
    $region60: #{generator_forward.1} parent=5 // pred_fallthru
      _
  $region6: #{generator_forward.1} parent=0 // loop_footer
    %s18 = sadd.s32 1, %s14
  $region7: #{generator_forward.1} parent=0 // loop_footer_branch
    %13 = sbr.rel target = $region3
  $region8: #{generator_forward.1} parent=0 // loop_exit
    _

</llo_original>
